<compile_context>
chip_gen: v5e
topology: v5e:2x2
jax: 0.10.0
libtpu: 0.0.40
codegen_flags: <defaults>
</compile_context>

<pallas_src>
import functools

import jax
import jax.numpy as jnp
from jax.experimental import pallas as pl
from jax.experimental.pallas import tpu as pltpu


def _round_up(v, m):
    return -(-v // m) * m


def _dot(a, b):
    """f32-accumulating dot; full f32 precision when both operands are f32."""
    prec = (jax.lax.Precision.HIGHEST
            if a.dtype == jnp.float32 and b.dtype == jnp.float32 else None)
    return jnp.dot(a, b, preferred_element_type=jnp.float32, precision=prec)


def _se_kernel(x_ref, pool_ref, bcast_ref, w1g_ref, w2g_ref, o_ref, *,
               b_tile, rows, n_groups, inv_hw):
    """One grid step over a (b_tile*rows, L) slab.

    x_ref/o_ref : (b_tile*rows, L); lane l -> (group g = l // HW, pos l % HW)
    pool_ref    : (L, G)  one-hot group-pool matrix, x dtype (VMEM-resident)
    bcast_ref   : (G, L)  one-hot group-broadcast matrix, f32 (VMEM-resident)
    w1g_ref     : (G, hidden, rows)  w1g[g, h, r] = w1[h, r*G + g]
    w2g_ref     : (G, rows, hidden)  w2g[g, r, h] = w2[r*G + g, h]
    Channel of (row r, group g) is c = r*G + g.
    """
    slab = x_ref[...]                                            # native dtype

    # ---- Squeeze: one MXU pass -> per-(batch,row,group) spatial means.
    pooled = _dot(slab, pool_ref[...]) * inv_hw                  # (b_tile*rows, G) f32

    # ---- Excite: tiny GEMMs (hidden = C // ratio), f32 accumulation.
    scale_rows = []
    for b in range(b_tile):
        pb = pooled[b * rows:(b + 1) * rows, :]                  # (rows, G)
        y1 = _dot(w1g_ref[0], pb[:, 0:1])                        # (hidden, 1)
        for g in range(1, n_groups):
            y1 = y1 + _dot(w1g_ref[g], pb[:, g:g + 1])
        y1 = jnp.maximum(y1, 0.0)                                # ReLU
        cols = [jax.nn.sigmoid(_dot(w2g_ref[g], y1))
                for g in range(n_groups)]                        # G x (rows, 1)
        scale_rows.append(cols[0] if n_groups == 1
                          else jnp.concatenate(cols, axis=1))    # (rows, G)
    s_all = (scale_rows[0] if b_tile == 1
             else jnp.concatenate(scale_rows, axis=0))           # (b_tile*rows, G)

    # ---- Rescale: MXU broadcast of per-channel scales over spatial lanes,
    # then a single slab-wide multiply + store.
    scale_slab = _dot(s_all, bcast_ref[...])                     # (b_tile*rows, L)
    o_ref[...] = (slab.astype(jnp.float32) * scale_slab).astype(o_ref.dtype)


def make_se_params(w1, w2, hw, x_dtype=jnp.float32):
    """Precompute VMEM-resident kernel operands (run once, outside hot path).

    w1: (hidden, C)  [nn.Linear(c1, c1//ratio, bias=False) weight]
    w2: (C, hidden)  [nn.Linear(c1//ratio, c1, bias=False) weight]
    hw: H * W of the feature map.
    """
    hidden, C = w1.shape
    assert w2.shape == (C, hidden)

    # Channel-group fold so the lane (last) dim is a multiple of 128.
    G = 1
    for g in range(1, C + 1):
        if C % g == 0 and (g * hw) % 128 == 0:
            G = g
            break
    R = C // G
    L = G * hw

    w1f = jnp.asarray(w1, jnp.float32)
    w2f = jnp.asarray(w2, jnp.float32)
    # Channel c = r*G + g  ->  group the linear weights per channel group.
    w1g = jnp.stack([w1f[:, g::G] for g in range(G)], axis=0)    # (G, hidden, R)
    w2g = jnp.stack([w2f[g::G, :] for g in range(G)], axis=0)    # (G, R, hidden)

    lane_group = jnp.arange(L, dtype=jnp.int32) // hw            # (L,)
    oneh = jax.nn.one_hot(lane_group, G, dtype=jnp.float32)      # (L, G), 0/1
    pool_map = oneh.astype(x_dtype)                              # (L, G)
    bcast_map = oneh.T                                           # (G, L), f32

    return dict(G=G, R=R, L=L, HW=hw, C=C, hidden=hidden,
                w1g=w1g, w2g=w2g, pool_map=pool_map, bcast_map=bcast_map)


def se_apply(x, params):
    """SE forward with precomputed params. x: (B, C, H, W)."""
    B, C, H, W = x.shape
    G, R, L = params["G"], params["R"], params["L"]
    HW, hidden = params["HW"], params["hidden"]
    assert C == params["C"] and H * W == HW

    x_fold = x.reshape(B * R, L)                 # free contiguous reshape

    # --- VMEM-aware batch tiling (generation aware) -----------------------
    try:
        vmem_cap = int(getattr(pltpu.get_tpu_info(), "vmem_capacity_bytes", 0))
    except Exception:
        vmem_cap = 0
    if vmem_cap <= 0:
        vmem_cap = 64 * 1024 * 1024              # conservative (v7x-sized)
    vmem_budget = (3 * vmem_cap) // 8            # 48 MiB on 128-MiB chips, 24 MiB on v7x
    vmem_limit = (3 * vmem_cap) // 4             # 96 MiB / 48 MiB

    native_bytes = _round_up(R, 8) * _round_up(L, 128) * x.dtype.itemsize
    f32_bytes = _round_up(R, 8) * _round_up(L, 128) * 4
    # in + out double-buffered slabs (native dtype) + in-kernel f32 temporaries
    per_batch_cost = 4 * native_bytes + 2 * f32_bytes
    bt_cap = max(1, min(B, vmem_budget // per_batch_cost))

    # Keep several grid steps alive (DMA overlap + dual-TensorCore sharding on
    # v7x) only when a per-batch tile is big enough for pipelining to matter;
    # never force extra 0.35-us steps for tiny launch-overhead-bound tiles.
    if native_bytes >= (1 << 20) and B >= 4:
        bt_cap = min(bt_cap, max(1, B // 4))
    elif native_bytes >= (256 << 10) and B >= 2:
        bt_cap = min(bt_cap, max(1, B // 2))

    B_TILE = 1
    for cand in range(bt_cap, 0, -1):
        # un-ragged grid + sublane-friendly (multiple-of-8 or full-dim) block
        if B % cand == 0 and ((cand * R) % 8 == 0 or cand == B):
            B_TILE = cand
            break
    grid = (B // B_TILE,)

    kernel = functools.partial(_se_kernel, b_tile=B_TILE, rows=R, n_groups=G,
                               inv_hw=1.0 / HW)

    itemsize = x.dtype.itemsize
    cost = pl.CostEstimate(
        flops=int(5 * B * C * HW + 4 * B * C * hidden),
        transcendentals=int(B * C),
        bytes_accessed=int(2 * B * C * HW * itemsize
                           + 2 * C * hidden * 4 + 2 * L * G * 4),
    )

    out_fold = pl.pallas_call(
        kernel,
        out_shape=jax.ShapeDtypeStruct((B * R, L), x.dtype),
        grid_spec=pltpu.PrefetchScalarGridSpec(
            num_scalar_prefetch=0,
            grid=grid,
            in_specs=[
                pl.BlockSpec((B_TILE * R, L), lambda i: (i, 0)),
                pl.BlockSpec((L, G), lambda i: (0, 0)),            # resident
                pl.BlockSpec((G, L), lambda i: (0, 0)),            # resident
                pl.BlockSpec((G, hidden, R), lambda i: (0, 0, 0)),  # resident
                pl.BlockSpec((G, R, hidden), lambda i: (0, 0, 0)),  # resident
            ],
            out_specs=pl.BlockSpec((B_TILE * R, L), lambda i: (i, 0)),
        ),
        compiler_params=pltpu.CompilerParams(
            dimension_semantics=("parallel",),
            vmem_limit_bytes=int(vmem_limit),
        ),
        cost_estimate=cost,
    )(x_fold, params["pool_map"], params["bcast_map"],
      params["w1g"], params["w2g"])

    return out_fold.reshape(B, C, H, W)


def se_forward(x, w1, w2):
    """Convenience wrapper: prep (once) + apply. Prefer make_se_params +
    se_apply in a real model so the weight regrouping stays off the hot path."""
    params = make_se_params(w1, w2, x.shape[2] * x.shape[3], x.dtype)
    return se_apply(x, params)


def se_reference(x, w1, w2):
    """Pure-JAX reference matching the PyTorch forward."""
    y = jnp.mean(x, axis=(2, 3))                 # (B, C)
    y = jnp.maximum(y @ w1.T, 0.0)               # (B, C//r), ReLU
    y = jax.nn.sigmoid(y @ w2.T)                 # (B, C)
    return x * y[:, :, None, None]


if __name__ == "__main__":
    # Module config: SE(c1=32, c2=32, ratio=16) -> hidden = 2
    B, C, H, W = 2, 32, 8, 8
    ratio = 16
    hidden = C // ratio

    key = jax.random.PRNGKey(0)
    kx, k1, k2 = jax.random.split(key, 3)

    x = jax.random.normal(kx, (B, C, H, W), dtype=jnp.float32)
    bound1 = 1.0 / (C ** 0.5)
    bound2 = 1.0 / (hidden ** 0.5)
    w1 = jax.random.uniform(k1, (hidden, C), jnp.float32, -bound1, bound1)
    w2 = jax.random.uniform(k2, (C, hidden), jnp.float32, -bound2, bound2)

    params = make_se_params(w1, w2, H * W, x.dtype)   # one-time prep
    out = jax.block_until_ready(se_apply(x, params))
    ref = se_reference(x, w1, w2)

    assert out.shape == (B, C, H, W)
    assert jnp.allclose(out, ref, atol=1e-4, rtol=1e-4), "mismatch vs reference"
    print("KERNEL_OK")
</pallas_src>

<mosaic_0001>
module attributes {stable_mosaic.version = 11 : i64} {
  func.func @_se_kernel(%arg0: i32, %arg1: memref<32x128xf32, #tpu.memory_space<vmem>>, %arg2: memref<128x2xf32, #tpu.memory_space<vmem>>, %arg3: memref<2x128xf32, #tpu.memory_space<vmem>>, %arg4: memref<2x2x16xf32, #tpu.memory_space<vmem>>, %arg5: memref<2x16x2xf32, #tpu.memory_space<vmem>>, %arg6: memref<32x128xf32, #tpu.memory_space<vmem>>) attributes {dimension_semantics = [#tpu.dimension_semantics<parallel>], iteration_bounds = array<i64: 1>, scalar_prefetch = 0 : i64, scratch_operands = 0 : i64, tpu.core_type = #tpu.core_type<tc>, window_params = [{transform_indices = @transform_0, window_bounds = array<i64: 32, 128>}, {pipeline_mode = #tpu.pipeline_mode<synchronous>, transform_indices = @transform_1, window_bounds = array<i64: 128, 2>}, {pipeline_mode = #tpu.pipeline_mode<synchronous>, transform_indices = @transform_2, window_bounds = array<i64: 2, 128>}, {pipeline_mode = #tpu.pipeline_mode<synchronous>, transform_indices = @transform_3, window_bounds = array<i64: 2, 2, 16>}, {pipeline_mode = #tpu.pipeline_mode<synchronous>, transform_indices = @transform_4, window_bounds = array<i64: 2, 16, 2>}, {transform_indices = @transform_5, window_bounds = array<i64: 32, 128>}]} {
    %c0 = arith.constant 0 : index
    %c0_0 = arith.constant 0 : index
    %0 = vector.load %arg1[%c0, %c0_0] : memref<32x128xf32, #tpu.memory_space<vmem>>, vector<32x128xf32>
    %c0_1 = arith.constant 0 : index
    %c0_2 = arith.constant 0 : index
    %1 = vector.load %arg2[%c0_1, %c0_2] : memref<128x2xf32, #tpu.memory_space<vmem>>, vector<128x2xf32>
    %cst = arith.constant dense<0.000000e+00> : vector<32x2xf32>
    %2 = tpu.matmul %0, %1, %cst {dimension_numbers = #tpu.dot_dimension_numbers<[1], [0], [0], [1], [0, 0, 1, 1], [], []>, precision = #tpu.contract_precision<fp32>} : vector<32x128xf32>, vector<128x2xf32>, vector<32x2xf32> -> vector<32x2xf32>
    %cst_3 = arith.constant 1.562500e-02 : f32
    %3 = vector.broadcast %cst_3 : f32 to vector<32x2xf32>
    %4 = arith.mulf %2, %3 : vector<32x2xf32>
    %5 = vector.extract_strided_slice %4 {offsets = [0, 0], sizes = [16, 2], strides = [1, 1]} : vector<32x2xf32> to vector<16x2xf32>
    %c0_4 = arith.constant 0 : index
    %c0_5 = arith.constant 0 : index
    %c0_6 = arith.constant 0 : index
    %6 = vector.load %arg4[%c0_4, %c0_5, %c0_6] : memref<2x2x16xf32, #tpu.memory_space<vmem>>, vector<1x2x16xf32>
    %7 = vector.shape_cast %6 : vector<1x2x16xf32> to vector<2x16xf32>
    %8 = vector.extract_strided_slice %5 {offsets = [0, 0], sizes = [16, 1], strides = [1, 1]} : vector<16x2xf32> to vector<16x1xf32>
    %cst_7 = arith.constant dense<0.000000e+00> : vector<2x1xf32>
    %9 = tpu.matmul %7, %8, %cst_7 {dimension_numbers = #tpu.dot_dimension_numbers<[1], [0], [0], [1], [0, 0, 1, 1], [], []>, precision = #tpu.contract_precision<fp32>} : vector<2x16xf32>, vector<16x1xf32>, vector<2x1xf32> -> vector<2x1xf32>
    %c1 = arith.constant 1 : index
    %c0_8 = arith.constant 0 : index
    %c0_9 = arith.constant 0 : index
    %10 = vector.load %arg4[%c1, %c0_8, %c0_9] : memref<2x2x16xf32, #tpu.memory_space<vmem>>, vector<1x2x16xf32>
    %11 = vector.shape_cast %10 : vector<1x2x16xf32> to vector<2x16xf32>
    %12 = vector.extract_strided_slice %5 {offsets = [0, 1], sizes = [16, 1], strides = [1, 1]} : vector<16x2xf32> to vector<16x1xf32>
    %cst_10 = arith.constant dense<0.000000e+00> : vector<2x1xf32>
    %13 = tpu.matmul %11, %12, %cst_10 {dimension_numbers = #tpu.dot_dimension_numbers<[1], [0], [0], [1], [0, 0, 1, 1], [], []>, precision = #tpu.contract_precision<fp32>} : vector<2x16xf32>, vector<16x1xf32>, vector<2x1xf32> -> vector<2x1xf32>
    %14 = arith.addf %9, %13 : vector<2x1xf32>
    %cst_11 = arith.constant 0.000000e+00 : f32
    %15 = vector.broadcast %cst_11 : f32 to vector<2x1xf32>
    %16 = arith.maximumf %14, %15 : vector<2x1xf32>
    %c0_12 = arith.constant 0 : index
    %c0_13 = arith.constant 0 : index
    %c0_14 = arith.constant 0 : index
    %17 = vector.load %arg5[%c0_12, %c0_13, %c0_14] : memref<2x16x2xf32, #tpu.memory_space<vmem>>, vector<1x16x2xf32>
    %18 = vector.shape_cast %17 : vector<1x16x2xf32> to vector<16x2xf32>
    %cst_15 = arith.constant dense<0.000000e+00> : vector<16x1xf32>
    %19 = tpu.matmul %18, %16, %cst_15 {dimension_numbers = #tpu.dot_dimension_numbers<[1], [0], [0], [1], [0, 0, 1, 1], [], []>, precision = #tpu.contract_precision<fp32>} : vector<16x2xf32>, vector<2x1xf32>, vector<16x1xf32> -> vector<16x1xf32>
    %20 = arith.negf %19 : vector<16x1xf32>
    %21 = math.exp %20 : vector<16x1xf32>
    %cst_16 = arith.constant 1.000000e+00 : f32
    %22 = vector.broadcast %cst_16 : f32 to vector<16x1xf32>
    %23 = arith.addf %22, %21 : vector<16x1xf32>
    %24 = arith.divf %22, %23 : vector<16x1xf32>
    %c1_17 = arith.constant 1 : index
    %c0_18 = arith.constant 0 : index
    %c0_19 = arith.constant 0 : index
    %25 = vector.load %arg5[%c1_17, %c0_18, %c0_19] : memref<2x16x2xf32, #tpu.memory_space<vmem>>, vector<1x16x2xf32>
    %26 = vector.shape_cast %25 : vector<1x16x2xf32> to vector<16x2xf32>
    %cst_20 = arith.constant dense<0.000000e+00> : vector<16x1xf32>
    %27 = tpu.matmul %26, %16, %cst_20 {dimension_numbers = #tpu.dot_dimension_numbers<[1], [0], [0], [1], [0, 0, 1, 1], [], []>, precision = #tpu.contract_precision<fp32>} : vector<16x2xf32>, vector<2x1xf32>, vector<16x1xf32> -> vector<16x1xf32>
    %28 = arith.negf %27 : vector<16x1xf32>
    %29 = math.exp %28 : vector<16x1xf32>
    %cst_21 = arith.constant 1.000000e+00 : f32
    %30 = vector.broadcast %cst_21 : f32 to vector<16x1xf32>
    %31 = arith.addf %30, %29 : vector<16x1xf32>
    %32 = arith.divf %30, %31 : vector<16x1xf32>
    %33 = tpu.concatenate %24, %32 in 1 : vector<16x1xf32>, vector<16x1xf32> -> vector<16x2xf32>
    %34 = vector.extract_strided_slice %4 {offsets = [16, 0], sizes = [16, 2], strides = [1, 1]} : vector<32x2xf32> to vector<16x2xf32>
    %c0_22 = arith.constant 0 : index
    %c0_23 = arith.constant 0 : index
    %c0_24 = arith.constant 0 : index
    %35 = vector.load %arg4[%c0_22, %c0_23, %c0_24] : memref<2x2x16xf32, #tpu.memory_space<vmem>>, vector<1x2x16xf32>
    %36 = vector.shape_cast %35 : vector<1x2x16xf32> to vector<2x16xf32>
    %37 = vector.extract_strided_slice %34 {offsets = [0, 0], sizes = [16, 1], strides = [1, 1]} : vector<16x2xf32> to vector<16x1xf32>
    %cst_25 = arith.constant dense<0.000000e+00> : vector<2x1xf32>
    %38 = tpu.matmul %36, %37, %cst_25 {dimension_numbers = #tpu.dot_dimension_numbers<[1], [0], [0], [1], [0, 0, 1, 1], [], []>, precision = #tpu.contract_precision<fp32>} : vector<2x16xf32>, vector<16x1xf32>, vector<2x1xf32> -> vector<2x1xf32>
    %c1_26 = arith.constant 1 : index
    %c0_27 = arith.constant 0 : index
    %c0_28 = arith.constant 0 : index
    %39 = vector.load %arg4[%c1_26, %c0_27, %c0_28] : memref<2x2x16xf32, #tpu.memory_space<vmem>>, vector<1x2x16xf32>
    %40 = vector.shape_cast %39 : vector<1x2x16xf32> to vector<2x16xf32>
    %41 = vector.extract_strided_slice %34 {offsets = [0, 1], sizes = [16, 1], strides = [1, 1]} : vector<16x2xf32> to vector<16x1xf32>
    %cst_29 = arith.constant dense<0.000000e+00> : vector<2x1xf32>
    %42 = tpu.matmul %40, %41, %cst_29 {dimension_numbers = #tpu.dot_dimension_numbers<[1], [0], [0], [1], [0, 0, 1, 1], [], []>, precision = #tpu.contract_precision<fp32>} : vector<2x16xf32>, vector<16x1xf32>, vector<2x1xf32> -> vector<2x1xf32>
    %43 = arith.addf %38, %42 : vector<2x1xf32>
    %cst_30 = arith.constant 0.000000e+00 : f32
    %44 = vector.broadcast %cst_30 : f32 to vector<2x1xf32>
    %45 = arith.maximumf %43, %44 : vector<2x1xf32>
    %c0_31 = arith.constant 0 : index
    %c0_32 = arith.constant 0 : index
    %c0_33 = arith.constant 0 : index
    %46 = vector.load %arg5[%c0_31, %c0_32, %c0_33] : memref<2x16x2xf32, #tpu.memory_space<vmem>>, vector<1x16x2xf32>
    %47 = vector.shape_cast %46 : vector<1x16x2xf32> to vector<16x2xf32>
    %cst_34 = arith.constant dense<0.000000e+00> : vector<16x1xf32>
    %48 = tpu.matmul %47, %45, %cst_34 {dimension_numbers = #tpu.dot_dimension_numbers<[1], [0], [0], [1], [0, 0, 1, 1], [], []>, precision = #tpu.contract_precision<fp32>} : vector<16x2xf32>, vector<2x1xf32>, vector<16x1xf32> -> vector<16x1xf32>
    %49 = arith.negf %48 : vector<16x1xf32>
    %50 = math.exp %49 : vector<16x1xf32>
    %cst_35 = arith.constant 1.000000e+00 : f32
    %51 = vector.broadcast %cst_35 : f32 to vector<16x1xf32>
    %52 = arith.addf %51, %50 : vector<16x1xf32>
    %53 = arith.divf %51, %52 : vector<16x1xf32>
    %c1_36 = arith.constant 1 : index
    %c0_37 = arith.constant 0 : index
    %c0_38 = arith.constant 0 : index
    %54 = vector.load %arg5[%c1_36, %c0_37, %c0_38] : memref<2x16x2xf32, #tpu.memory_space<vmem>>, vector<1x16x2xf32>
    %55 = vector.shape_cast %54 : vector<1x16x2xf32> to vector<16x2xf32>
    %cst_39 = arith.constant dense<0.000000e+00> : vector<16x1xf32>
    %56 = tpu.matmul %55, %45, %cst_39 {dimension_numbers = #tpu.dot_dimension_numbers<[1], [0], [0], [1], [0, 0, 1, 1], [], []>, precision = #tpu.contract_precision<fp32>} : vector<16x2xf32>, vector<2x1xf32>, vector<16x1xf32> -> vector<16x1xf32>
    %57 = arith.negf %56 : vector<16x1xf32>
    %58 = math.exp %57 : vector<16x1xf32>
    %cst_40 = arith.constant 1.000000e+00 : f32
    %59 = vector.broadcast %cst_40 : f32 to vector<16x1xf32>
    %60 = arith.addf %59, %58 : vector<16x1xf32>
    %61 = arith.divf %59, %60 : vector<16x1xf32>
    %62 = tpu.concatenate %53, %61 in 1 : vector<16x1xf32>, vector<16x1xf32> -> vector<16x2xf32>
    %63 = tpu.concatenate %33, %62 in 0 : vector<16x2xf32>, vector<16x2xf32> -> vector<32x2xf32>
    %c0_41 = arith.constant 0 : index
    %c0_42 = arith.constant 0 : index
    %64 = vector.load %arg3[%c0_41, %c0_42] : memref<2x128xf32, #tpu.memory_space<vmem>>, vector<2x128xf32>
    %cst_43 = arith.constant dense<0.000000e+00> : vector<32x128xf32>
    %65 = tpu.matmul %63, %64, %cst_43 {dimension_numbers = #tpu.dot_dimension_numbers<[1], [0], [0], [1], [0, 0, 1, 1], [], []>, precision = #tpu.contract_precision<fp32>} : vector<32x2xf32>, vector<2x128xf32>, vector<32x128xf32> -> vector<32x128xf32>
    %66 = arith.mulf %0, %65 : vector<32x128xf32>
    %c0_44 = arith.constant 0 : index
    %c0_45 = arith.constant 0 : index
    %67 = vector.load %arg6[%c0_44, %c0_45] : memref<32x128xf32, #tpu.memory_space<vmem>>, vector<32x128xf32>
    tpu.vector_store %arg6[%c0_44, %c0_45], %66 {strides = array<i32>} : memref<32x128xf32, #tpu.memory_space<vmem>>, vector<32x128xf32>,
    return
  }
  func.func @transform_0(%arg0: i32) -> (i32, i32) {
    %c0_i32 = arith.constant 0 : i32
    %c0_i32_0 = arith.constant 0 : i32
    return %arg0, %c0_i32 : i32, i32
  }
  func.func @transform_1(%arg0: i32) -> (i32, i32) {
    %c0_i32 = arith.constant 0 : i32
    %c0_i32_0 = arith.constant 0 : i32
    %c0_i32_1 = arith.constant 0 : i32
    return %c0_i32, %c0_i32_0 : i32, i32
  }
  func.func @transform_2(%arg0: i32) -> (i32, i32) {
    %c0_i32 = arith.constant 0 : i32
    %c0_i32_0 = arith.constant 0 : i32
    %c0_i32_1 = arith.constant 0 : i32
    return %c0_i32, %c0_i32_0 : i32, i32
  }
  func.func @transform_3(%arg0: i32) -> (i32, i32, i32) {
    %c0_i32 = arith.constant 0 : i32
    %c0_i32_0 = arith.constant 0 : i32
    %c0_i32_1 = arith.constant 0 : i32
    %c0_i32_2 = arith.constant 0 : i32
    return %c0_i32, %c0_i32_0, %c0_i32_1 : i32, i32, i32
  }
  func.func @transform_4(%arg0: i32) -> (i32, i32, i32) {
    %c0_i32 = arith.constant 0 : i32
    %c0_i32_0 = arith.constant 0 : i32
    %c0_i32_1 = arith.constant 0 : i32
    %c0_i32_2 = arith.constant 0 : i32
    return %c0_i32, %c0_i32_0, %c0_i32_1 : i32, i32, i32
  }
  func.func @transform_5(%arg0: i32) -> (i32, i32) {
    %c0_i32 = arith.constant 0 : i32
    %c0_i32_0 = arith.constant 0 : i32
    return %arg0, %c0_i32 : i32, i32
  }
}

</mosaic_0001>

<llo_original>
// kernel: tpu_custom_call.1
$region0: #{tpu_custom_call.1}
  #allocation0 [shape = 'u32[]', space=smem, size = 0x4, offset = 0x4, fixed_abs, tag = 'smem constant byte address 0x4 - core index']
  #allocation1 [shape = 'u32[72,128]{1,0:T(1,128)}', space=vmem, size = 0x9000, scoped, tag = 'internal scratch']
  %s0 = inlined_call_operand.vmem [shape: f32[32,128], index: 0, kind: input, shape index: {}]
  %s1 = inlined_call_operand.vmem [shape: f32[128,2], index: 1, kind: input, shape index: {}]
  %s2 = inlined_call_operand.vmem [shape: f32[2,128], index: 2, kind: input, shape index: {}]
  %s3 = inlined_call_operand.vmem [shape: f32[2,2,16], index: 3, kind: input, shape index: {}]
  %s4 = inlined_call_operand.vmem [shape: f32[2,16,2], index: 4, kind: input, shape index: {}]
  %s5 = inlined_call_operand.hbm [shape: f32[32,128], index: 5, kind: output, shape index: {}]
  %s6 = sld [smem:[#allocation0]]
  $region30: #{tpu_custom_call.1} parent=0
    _
  %s8 = ssub.s32 1, %s6
  %s9 = scalar_select 0, %s8, %s6
  $region1: #{tpu_custom_call.1} parent=0
    #allocation2 [shape = 'u8[16384]{0}', space=vmem, size = 0x4000, scoped, tag = 'output window, operand 0, single buffered']
    #allocation3 [shape = 's32[1]{0}', space=sflag, size = 0x4, scoped, tag = 'scoped memory for tpu_custom_call.1']
    %10 = vsyncpa [#allocation3], 0
    // Predicated region
    $region2: #{tpu_custom_call.1} parent=1 // pred_check
      _
    $region3: #{tpu_custom_call.1} parent=1 // pred_check_branch
      %12 = sbr.rel (0) target = $region5
    $region4: #{tpu_custom_call.1} parent=1 // pred_region
      _
    $region5: #{tpu_custom_call.1} parent=1 // pred_fallthru
      _
    // Predicated region
    $region6: #{tpu_custom_call.1} parent=1 // pred_check
      _
    $region7: #{tpu_custom_call.1} parent=1 // pred_check_branch
      %14 = sbr.rel (0) target = $region9
    $region8: #{tpu_custom_call.1} parent=1 // pred_region
      _
    $region9: #{tpu_custom_call.1} parent=1 // pred_fallthru
      _
    // Predicated region
    $region10: #{tpu_custom_call.1} parent=1 // pred_check
      _
    $region11: #{tpu_custom_call.1} parent=1 // pred_check_branch
      %16 = sbr.rel (0) target = $region13
    $region12: #{tpu_custom_call.1} parent=1 // pred_region
      _
    $region13: #{tpu_custom_call.1} parent=1 // pred_fallthru
      _
    // Predicated region
    $region14: #{tpu_custom_call.1} parent=1 // pred_check
      _
    $region15: #{tpu_custom_call.1} parent=1 // pred_check_branch
      %18 = sbr.rel (0) target = $region17
    $region16: #{tpu_custom_call.1} parent=1 // pred_region
      _
    $region17: #{tpu_custom_call.1} parent=1 // pred_fallthru
      _
    // Predicated region
    $region18: #{tpu_custom_call.1} parent=1 // pred_check
      _
    $region19: #{tpu_custom_call.1} parent=1 // pred_check_branch
      %20 = sbr.rel (0) target = $region21
    $region20: #{tpu_custom_call.1} parent=1 // pred_region
      _
    $region21: #{tpu_custom_call.1} parent=1 // pred_fallthru
      _
    %v21 = vld [vmem:[%s0] sm:$0xff]
    %v22 = vld [vmem:[%s0 + $0x8] sm:$0xff]
    %v23 = vld [vmem:[%s0 + $0x10] sm:$0xff]
    %v24 = vld [vmem:[%s0 + $0x18] sm:$0xff]
    %v25 = vld [vmem:[%s1] sm:$0xff]
    %v26 = vld [vmem:[%s1 + $0x8] sm:$0xff]
    %v27 = vld [vmem:[%s1 + $0x10] sm:$0xff]
    %v28 = vld [vmem:[%s1 + $0x18] sm:$0xff]
    %v29 = vld [vmem:[%s1 + $0x20] sm:$0xff]
    %v30 = vld [vmem:[%s1 + $0x28] sm:$0xff]
    %v31 = vld [vmem:[%s1 + $0x30] sm:$0xff]
    %v32 = vld [vmem:[%s1 + $0x38] sm:$0xff]
    %v33 = vld [vmem:[%s1 + $0x40] sm:$0xff]
    %v34 = vld [vmem:[%s1 + $0x48] sm:$0xff]
    %v35 = vld [vmem:[%s1 + $0x50] sm:$0xff]
    %v36 = vld [vmem:[%s1 + $0x58] sm:$0xff]
    %v37 = vld [vmem:[%s1 + $0x60] sm:$0xff]
    %v38 = vld [vmem:[%s1 + $0x68] sm:$0xff]
    %v39 = vld [vmem:[%s1 + $0x70] sm:$0xff]
    %v40 = vld [vmem:[%s1 + $0x78] sm:$0xff]
    %v41 = vand.u32 %v40, 4294901760
    %42 = vmatpush.msra.mxu0 %v41
    %v43 = vand.u32 %v39, 4294901760
    %44 = vmatpush.msra.mxu0 %v43
    %v45 = vand.u32 %v38, 4294901760
    %46 = vmatpush.msra.mxu0 %v45
    %v47 = vand.u32 %v37, 4294901760
    %48 = vmatpush.msra.mxu0 %v47
    %v49 = vand.u32 %v36, 4294901760
    %50 = vmatpush.msra.mxu0 %v49
    %v51 = vand.u32 %v35, 4294901760
    %52 = vmatpush.msra.mxu0 %v51
    %v53 = vand.u32 %v34, 4294901760
    %54 = vmatpush.msra.mxu0 %v53
    %v55 = vand.u32 %v33, 4294901760
    %56 = vmatpush.msra.mxu0 %v55
    %v57 = vand.u32 %v32, 4294901760
    %58 = vmatpush.msra.mxu0 %v57
    %v59 = vand.u32 %v31, 4294901760
    %60 = vmatpush.msra.mxu0 %v59
    %v61 = vand.u32 %v30, 4294901760
    %62 = vmatpush.msra.mxu0 %v61
    %v63 = vand.u32 %v29, 4294901760
    %64 = vmatpush.msra.mxu0 %v63
    %v65 = vand.u32 %v28, 4294901760
    %66 = vmatpush.msra.mxu0 %v65
    %v67 = vand.u32 %v27, 4294901760
    %68 = vmatpush.msra.mxu0 %v67
    %v69 = vand.u32 %v26, 4294901760
    %70 = vmatpush.msra.mxu0 %v69
    %v71 = vand.u32 %v25, 4294901760
    %72 = vmatpush.msra.mxu0 %v71
    %v73 = vand.u32 %v21, 4294901760
    %v74 = vsub.f32 %v21, %v73
    %v75 = vand.u32 %v74, 4294901760
    %v76 = vsub.f32 %v74, %v75
    %v77 = vand.u32 %v76, 4294901760
    %78 = vmatmul.f32.gmra.mxu0 %v77
    %v79 = vpop.f32.mrf.mxu0
    %v80 = vadd.f32 0.0, %v79
    %v81 = vand.u32 %v22, 4294901760
    %v82 = vsub.f32 %v22, %v81
    %v83 = vand.u32 %v82, 4294901760
    %v84 = vsub.f32 %v82, %v83
    %v85 = vand.u32 %v84, 4294901760
    %86 = vmatmul.f32.gmra.mxu0 %v85
    %v87 = vpop.f32.mrf.mxu0
    %v88 = vadd.f32 0.0, %v87
    %v89 = vand.u32 %v23, 4294901760
    %v90 = vsub.f32 %v23, %v89
    %v91 = vand.u32 %v90, 4294901760
    %v92 = vsub.f32 %v90, %v91
    %v93 = vand.u32 %v92, 4294901760
    %94 = vmatmul.f32.gmra.mxu0 %v93
    %v95 = vpop.f32.mrf.mxu0
    %v96 = vadd.f32 0.0, %v95
    %v97 = vand.u32 %v24, 4294901760
    %v98 = vsub.f32 %v24, %v97
    %v99 = vand.u32 %v98, 4294901760
    %v100 = vsub.f32 %v98, %v99
    %v101 = vand.u32 %v100, 4294901760
    %102 = vmatmul.f32.gmra.mxu0 %v101
    %v103 = vpop.f32.mrf.mxu0
    %v104 = vadd.f32 0.0, %v103
    %105 = vdwg.mxu0
    %v106 = vand.u32 %v40, 4294901760
    %v107 = vsub.f32 %v40, %v106
    %v108 = vand.u32 %v107, 4294901760
    %v109 = vsub.f32 %v107, %v108
    %v110 = vand.u32 %v109, 4294901760
    %111 = vmatpush.msra.mxu0 %v110
    %v112 = vand.u32 %v39, 4294901760
    %v113 = vsub.f32 %v39, %v112
    %v114 = vand.u32 %v113, 4294901760
    %v115 = vsub.f32 %v113, %v114
    %v116 = vand.u32 %v115, 4294901760
    %117 = vmatpush.msra.mxu0 %v116
    %v118 = vand.u32 %v38, 4294901760
    %v119 = vsub.f32 %v38, %v118
    %v120 = vand.u32 %v119, 4294901760
    %v121 = vsub.f32 %v119, %v120
    %v122 = vand.u32 %v121, 4294901760
    %123 = vmatpush.msra.mxu0 %v122
    %v124 = vand.u32 %v37, 4294901760
    %v125 = vsub.f32 %v37, %v124
    %v126 = vand.u32 %v125, 4294901760
    %v127 = vsub.f32 %v125, %v126
    %v128 = vand.u32 %v127, 4294901760
    %129 = vmatpush.msra.mxu0 %v128
    %v130 = vand.u32 %v36, 4294901760
    %v131 = vsub.f32 %v36, %v130
    %v132 = vand.u32 %v131, 4294901760
    %v133 = vsub.f32 %v131, %v132
    %v134 = vand.u32 %v133, 4294901760
    %135 = vmatpush.msra.mxu0 %v134
    %v136 = vand.u32 %v35, 4294901760
    %v137 = vsub.f32 %v35, %v136
    %v138 = vand.u32 %v137, 4294901760
    %v139 = vsub.f32 %v137, %v138
    %v140 = vand.u32 %v139, 4294901760
    %141 = vmatpush.msra.mxu0 %v140
    %v142 = vand.u32 %v34, 4294901760
    %v143 = vsub.f32 %v34, %v142
    %v144 = vand.u32 %v143, 4294901760
    %v145 = vsub.f32 %v143, %v144
    %v146 = vand.u32 %v145, 4294901760
    %147 = vmatpush.msra.mxu0 %v146
    %v148 = vand.u32 %v33, 4294901760
    %v149 = vsub.f32 %v33, %v148
    %v150 = vand.u32 %v149, 4294901760
    %v151 = vsub.f32 %v149, %v150
    %v152 = vand.u32 %v151, 4294901760
    %153 = vmatpush.msra.mxu0 %v152
    %v154 = vand.u32 %v32, 4294901760
    %v155 = vsub.f32 %v32, %v154
    %v156 = vand.u32 %v155, 4294901760
    %v157 = vsub.f32 %v155, %v156
    %v158 = vand.u32 %v157, 4294901760
    %159 = vmatpush.msra.mxu0 %v158
    %v160 = vand.u32 %v31, 4294901760
    %v161 = vsub.f32 %v31, %v160
    %v162 = vand.u32 %v161, 4294901760
    %v163 = vsub.f32 %v161, %v162
    %v164 = vand.u32 %v163, 4294901760
    %165 = vmatpush.msra.mxu0 %v164
    %v166 = vand.u32 %v30, 4294901760
    %v167 = vsub.f32 %v30, %v166
    %v168 = vand.u32 %v167, 4294901760
    %v169 = vsub.f32 %v167, %v168
    %v170 = vand.u32 %v169, 4294901760
    %171 = vmatpush.msra.mxu0 %v170
    %v172 = vand.u32 %v29, 4294901760
    %v173 = vsub.f32 %v29, %v172
    %v174 = vand.u32 %v173, 4294901760
    %v175 = vsub.f32 %v173, %v174
    %v176 = vand.u32 %v175, 4294901760
    %177 = vmatpush.msra.mxu0 %v176
    %v178 = vand.u32 %v28, 4294901760
    %v179 = vsub.f32 %v28, %v178
    %v180 = vand.u32 %v179, 4294901760
    %v181 = vsub.f32 %v179, %v180
    %v182 = vand.u32 %v181, 4294901760
    %183 = vmatpush.msra.mxu0 %v182
    %v184 = vand.u32 %v27, 4294901760
    %v185 = vsub.f32 %v27, %v184
    %v186 = vand.u32 %v185, 4294901760
    %v187 = vsub.f32 %v185, %v186
    %v188 = vand.u32 %v187, 4294901760
    %189 = vmatpush.msra.mxu0 %v188
    %v190 = vand.u32 %v26, 4294901760
    %v191 = vsub.f32 %v26, %v190
    %v192 = vand.u32 %v191, 4294901760
    %v193 = vsub.f32 %v191, %v192
    %v194 = vand.u32 %v193, 4294901760
    %195 = vmatpush.msra.mxu0 %v194
    %v196 = vand.u32 %v25, 4294901760
    %v197 = vsub.f32 %v25, %v196
    %v198 = vand.u32 %v197, 4294901760
    %v199 = vsub.f32 %v197, %v198
    %v200 = vand.u32 %v199, 4294901760
    %201 = vmatpush.msra.mxu0 %v200
    %v202 = vand.u32 %v21, 4294901760
    %203 = vmatmul.f32.gmra.mxu0 %v202
    %v204 = vpop.f32.mrf.mxu0
    %v205 = vadd.f32 %v80, %v204
    %v206 = vand.u32 %v22, 4294901760
    %207 = vmatmul.f32.gmra.mxu0 %v206
    %v208 = vpop.f32.mrf.mxu0
    %v209 = vadd.f32 %v88, %v208
    %v210 = vand.u32 %v23, 4294901760
    %211 = vmatmul.f32.gmra.mxu0 %v210
    %v212 = vpop.f32.mrf.mxu0
    %v213 = vadd.f32 %v96, %v212
    %v214 = vand.u32 %v24, 4294901760
    %215 = vmatmul.f32.gmra.mxu0 %v214
    %v216 = vpop.f32.mrf.mxu0
    %v217 = vadd.f32 %v104, %v216
    %218 = vdwg.mxu0
    %v219 = vand.u32 %v40, 4294901760
    %v220 = vsub.f32 %v40, %v219
    %221 = vmatpush.msra.mxu0 %v220
    %v222 = vand.u32 %v39, 4294901760
    %v223 = vsub.f32 %v39, %v222
    %224 = vmatpush.msra.mxu0 %v223
    %v225 = vand.u32 %v38, 4294901760
    %v226 = vsub.f32 %v38, %v225
    %227 = vmatpush.msra.mxu0 %v226
    %v228 = vand.u32 %v37, 4294901760
    %v229 = vsub.f32 %v37, %v228
    %230 = vmatpush.msra.mxu0 %v229
    %v231 = vand.u32 %v36, 4294901760
    %v232 = vsub.f32 %v36, %v231
    %233 = vmatpush.msra.mxu0 %v232
    %v234 = vand.u32 %v35, 4294901760
    %v235 = vsub.f32 %v35, %v234
    %236 = vmatpush.msra.mxu0 %v235
    %v237 = vand.u32 %v34, 4294901760
    %v238 = vsub.f32 %v34, %v237
    %239 = vmatpush.msra.mxu0 %v238
    %v240 = vand.u32 %v33, 4294901760
    %v241 = vsub.f32 %v33, %v240
    %242 = vmatpush.msra.mxu0 %v241
    %v243 = vand.u32 %v32, 4294901760
    %v244 = vsub.f32 %v32, %v243
    %245 = vmatpush.msra.mxu0 %v244
    %v246 = vand.u32 %v31, 4294901760
    %v247 = vsub.f32 %v31, %v246
    %248 = vmatpush.msra.mxu0 %v247
    %v249 = vand.u32 %v30, 4294901760
    %v250 = vsub.f32 %v30, %v249
    %251 = vmatpush.msra.mxu0 %v250
    %v252 = vand.u32 %v29, 4294901760
    %v253 = vsub.f32 %v29, %v252
    %254 = vmatpush.msra.mxu0 %v253
    %v255 = vand.u32 %v28, 4294901760
    %v256 = vsub.f32 %v28, %v255
    %257 = vmatpush.msra.mxu0 %v256
    %v258 = vand.u32 %v27, 4294901760
    %v259 = vsub.f32 %v27, %v258
    %260 = vmatpush.msra.mxu0 %v259
    %v261 = vand.u32 %v26, 4294901760
    %v262 = vsub.f32 %v26, %v261
    %263 = vmatpush.msra.mxu0 %v262
    %v264 = vand.u32 %v25, 4294901760
    %v265 = vsub.f32 %v25, %v264
    %266 = vmatpush.msra.mxu0 %v265
    %v267 = vand.u32 %v21, 4294901760
    %v268 = vsub.f32 %v21, %v267
    %269 = vmatmul.f32.gmra.mxu0 %v268
    %v270 = vpop.f32.mrf.mxu0
    %v271 = vadd.f32 %v205, %v270
    %v272 = vand.u32 %v22, 4294901760
    %v273 = vsub.f32 %v22, %v272
    %274 = vmatmul.f32.gmra.mxu0 %v273
    %v275 = vpop.f32.mrf.mxu0
    %v276 = vadd.f32 %v209, %v275
    %v277 = vand.u32 %v23, 4294901760
    %v278 = vsub.f32 %v23, %v277
    %279 = vmatmul.f32.gmra.mxu0 %v278
    %v280 = vpop.f32.mrf.mxu0
    %v281 = vadd.f32 %v213, %v280
    %v282 = vand.u32 %v24, 4294901760
    %v283 = vsub.f32 %v24, %v282
    %284 = vmatmul.f32.gmra.mxu0 %v283
    %v285 = vpop.f32.mrf.mxu0
    %v286 = vadd.f32 %v217, %v285
    %287 = vdwg.mxu0
    %v288 = vand.u32 %v40, 4294901760
    %289 = vmatpush.msra.mxu0 %v288
    %v290 = vand.u32 %v39, 4294901760
    %291 = vmatpush.msra.mxu0 %v290
    %v292 = vand.u32 %v38, 4294901760
    %293 = vmatpush.msra.mxu0 %v292
    %v294 = vand.u32 %v37, 4294901760
    %295 = vmatpush.msra.mxu0 %v294
    %v296 = vand.u32 %v36, 4294901760
    %297 = vmatpush.msra.mxu0 %v296
    %v298 = vand.u32 %v35, 4294901760
    %299 = vmatpush.msra.mxu0 %v298
    %v300 = vand.u32 %v34, 4294901760
    %301 = vmatpush.msra.mxu0 %v300
    %v302 = vand.u32 %v33, 4294901760
    %303 = vmatpush.msra.mxu0 %v302
    %v304 = vand.u32 %v32, 4294901760
    %305 = vmatpush.msra.mxu0 %v304
    %v306 = vand.u32 %v31, 4294901760
    %307 = vmatpush.msra.mxu0 %v306
    %v308 = vand.u32 %v30, 4294901760
    %309 = vmatpush.msra.mxu0 %v308
    %v310 = vand.u32 %v29, 4294901760
    %311 = vmatpush.msra.mxu0 %v310
    %v312 = vand.u32 %v28, 4294901760
    %313 = vmatpush.msra.mxu0 %v312
    %v314 = vand.u32 %v27, 4294901760
    %315 = vmatpush.msra.mxu0 %v314
    %v316 = vand.u32 %v26, 4294901760
    %317 = vmatpush.msra.mxu0 %v316
    %v318 = vand.u32 %v25, 4294901760
    %319 = vmatpush.msra.mxu0 %v318
    %v320 = vand.u32 %v21, 4294901760
    %v321 = vsub.f32 %v21, %v320
    %v322 = vand.u32 %v321, 4294901760
    %323 = vmatmul.f32.gmra.mxu0 %v322
    %v324 = vpop.f32.mrf.mxu0
    %v325 = vadd.f32 %v271, %v324
    %v326 = vand.u32 %v22, 4294901760
    %v327 = vsub.f32 %v22, %v326
    %v328 = vand.u32 %v327, 4294901760
    %329 = vmatmul.f32.gmra.mxu0 %v328
    %v330 = vpop.f32.mrf.mxu0
    %v331 = vadd.f32 %v276, %v330
    %v332 = vand.u32 %v23, 4294901760
    %v333 = vsub.f32 %v23, %v332
    %v334 = vand.u32 %v333, 4294901760
    %335 = vmatmul.f32.gmra.mxu0 %v334
    %v336 = vpop.f32.mrf.mxu0
    %v337 = vadd.f32 %v281, %v336
    %v338 = vand.u32 %v24, 4294901760
    %v339 = vsub.f32 %v24, %v338
    %v340 = vand.u32 %v339, 4294901760
    %341 = vmatmul.f32.gmra.mxu0 %v340
    %v342 = vpop.f32.mrf.mxu0
    %v343 = vadd.f32 %v286, %v342
    %344 = vdwg.mxu0
    %v345 = vand.u32 %v40, 4294901760
    %v346 = vsub.f32 %v40, %v345
    %v347 = vand.u32 %v346, 4294901760
    %348 = vmatpush.msra.mxu0 %v347
    %v349 = vand.u32 %v39, 4294901760
    %v350 = vsub.f32 %v39, %v349
    %v351 = vand.u32 %v350, 4294901760
    %352 = vmatpush.msra.mxu0 %v351
    %v353 = vand.u32 %v38, 4294901760
    %v354 = vsub.f32 %v38, %v353
    %v355 = vand.u32 %v354, 4294901760
    %356 = vmatpush.msra.mxu0 %v355
    %v357 = vand.u32 %v37, 4294901760
    %v358 = vsub.f32 %v37, %v357
    %v359 = vand.u32 %v358, 4294901760
    %360 = vmatpush.msra.mxu0 %v359
    %v361 = vand.u32 %v36, 4294901760
    %v362 = vsub.f32 %v36, %v361
    %v363 = vand.u32 %v362, 4294901760
    %364 = vmatpush.msra.mxu0 %v363
    %v365 = vand.u32 %v35, 4294901760
    %v366 = vsub.f32 %v35, %v365
    %v367 = vand.u32 %v366, 4294901760
    %368 = vmatpush.msra.mxu0 %v367
    %v369 = vand.u32 %v34, 4294901760
    %v370 = vsub.f32 %v34, %v369
    %v371 = vand.u32 %v370, 4294901760
    %372 = vmatpush.msra.mxu0 %v371
    %v373 = vand.u32 %v33, 4294901760
    %v374 = vsub.f32 %v33, %v373
    %v375 = vand.u32 %v374, 4294901760
    %376 = vmatpush.msra.mxu0 %v375
    %v377 = vand.u32 %v32, 4294901760
    %v378 = vsub.f32 %v32, %v377
    %v379 = vand.u32 %v378, 4294901760
    %380 = vmatpush.msra.mxu0 %v379
    %v381 = vand.u32 %v31, 4294901760
    %v382 = vsub.f32 %v31, %v381
    %v383 = vand.u32 %v382, 4294901760
    %384 = vmatpush.msra.mxu0 %v383
    %v385 = vand.u32 %v30, 4294901760
    %v386 = vsub.f32 %v30, %v385
    %v387 = vand.u32 %v386, 4294901760
    %388 = vmatpush.msra.mxu0 %v387
    %v389 = vand.u32 %v29, 4294901760
    %v390 = vsub.f32 %v29, %v389
    %v391 = vand.u32 %v390, 4294901760
    %392 = vmatpush.msra.mxu0 %v391
    %v393 = vand.u32 %v28, 4294901760
    %v394 = vsub.f32 %v28, %v393
    %v395 = vand.u32 %v394, 4294901760
    %396 = vmatpush.msra.mxu0 %v395
    %v397 = vand.u32 %v27, 4294901760
    %v398 = vsub.f32 %v27, %v397
    %v399 = vand.u32 %v398, 4294901760
    %400 = vmatpush.msra.mxu0 %v399
    %v401 = vand.u32 %v26, 4294901760
    %v402 = vsub.f32 %v26, %v401
    %v403 = vand.u32 %v402, 4294901760
    %404 = vmatpush.msra.mxu0 %v403
    %v405 = vand.u32 %v25, 4294901760
    %v406 = vsub.f32 %v25, %v405
    %v407 = vand.u32 %v406, 4294901760
    %408 = vmatpush.msra.mxu0 %v407
    %v409 = vand.u32 %v21, 4294901760
    %410 = vmatmul.f32.gmra.mxu0 %v409
    %v411 = vpop.f32.mrf.mxu0
    %v412 = vadd.f32 %v325, %v411
    %v413 = vand.u32 %v22, 4294901760
    %414 = vmatmul.f32.gmra.mxu0 %v413
    %v415 = vpop.f32.mrf.mxu0
    %v416 = vadd.f32 %v331, %v415
    %v417 = vand.u32 %v23, 4294901760
    %418 = vmatmul.f32.gmra.mxu0 %v417
    %v419 = vpop.f32.mrf.mxu0
    %v420 = vadd.f32 %v337, %v419
    %v421 = vand.u32 %v24, 4294901760
    %422 = vmatmul.f32.gmra.mxu0 %v421
    %v423 = vpop.f32.mrf.mxu0
    %v424 = vadd.f32 %v343, %v423
    %425 = vdwg.mxu0
    %v426 = vand.u32 %v40, 4294901760
    %427 = vmatpush.msra.mxu0 %v426
    %v428 = vand.u32 %v39, 4294901760
    %429 = vmatpush.msra.mxu0 %v428
    %v430 = vand.u32 %v38, 4294901760
    %431 = vmatpush.msra.mxu0 %v430
    %v432 = vand.u32 %v37, 4294901760
    %433 = vmatpush.msra.mxu0 %v432
    %v434 = vand.u32 %v36, 4294901760
    %435 = vmatpush.msra.mxu0 %v434
    %v436 = vand.u32 %v35, 4294901760
    %437 = vmatpush.msra.mxu0 %v436
    %v438 = vand.u32 %v34, 4294901760
    %439 = vmatpush.msra.mxu0 %v438
    %v440 = vand.u32 %v33, 4294901760
    %441 = vmatpush.msra.mxu0 %v440
    %v442 = vand.u32 %v32, 4294901760
    %443 = vmatpush.msra.mxu0 %v442
    %v444 = vand.u32 %v31, 4294901760
    %445 = vmatpush.msra.mxu0 %v444
    %v446 = vand.u32 %v30, 4294901760
    %447 = vmatpush.msra.mxu0 %v446
    %v448 = vand.u32 %v29, 4294901760
    %449 = vmatpush.msra.mxu0 %v448
    %v450 = vand.u32 %v28, 4294901760
    %451 = vmatpush.msra.mxu0 %v450
    %v452 = vand.u32 %v27, 4294901760
    %453 = vmatpush.msra.mxu0 %v452
    %v454 = vand.u32 %v26, 4294901760
    %455 = vmatpush.msra.mxu0 %v454
    %v456 = vand.u32 %v25, 4294901760
    %457 = vmatpush.msra.mxu0 %v456
    %v458 = vand.u32 %v21, 4294901760
    %459 = vmatmul.f32.gmra.mxu0 %v458
    %v460 = vpop.f32.mrf.mxu0
    %v461 = vadd.f32 %v412, %v460
    %v462 = vand.u32 %v22, 4294901760
    %463 = vmatmul.f32.gmra.mxu0 %v462
    %v464 = vpop.f32.mrf.mxu0
    %v465 = vadd.f32 %v416, %v464
    %v466 = vand.u32 %v23, 4294901760
    %467 = vmatmul.f32.gmra.mxu0 %v466
    %v468 = vpop.f32.mrf.mxu0
    %v469 = vadd.f32 %v420, %v468
    %v470 = vand.u32 %v24, 4294901760
    %471 = vmatmul.f32.gmra.mxu0 %v470
    %v472 = vpop.f32.mrf.mxu0
    %v473 = vadd.f32 %v424, %v472
    %474 = vdwg.mxu0
    %v475 = vmul.f32 %v461, 0.015625
    %v476 = vmul.f32 %v465, 0.015625
    %v477 = vmul.f32 %v469, 0.015625
    %v478 = vmul.f32 %v473, 0.015625
    %v479 = vld [vmem:[%s3] sm:$0x3]
    %s480 = scalar_lea.vmem %s3, 2
    %v481 = vld [vmem:[%s480] sm:$0x3]
    %484 = vrot.lane.b32.xlu0 %v475, 127
    %v485 = vpop.permute.xlu0 %484
    %486 = vrot.lane.b32.xlu0 %v476, 127
    %v487 = vpop.permute.xlu0 %486
    %vm490 = vcmask 130048
    %v492 = vsel %vm490, %v481, 0
    %494 = vmatpush.msra.mxu0 0.0
    %495 = vmatpush.msra.mxu0 0.0
    %496 = vmatpush.msra.mxu0 0.0
    %497 = vmatpush.msra.mxu0 0.0
    %498 = vmatpush.msra.mxu0 0.0
    %499 = vmatpush.msra.mxu0 0.0
    %500 = vmatpush.msra.mxu0 0.0
    %501 = vmatpush.msra.mxu0 0.0
    %502 = vmatpush.msra.mxu0 0.0
    %503 = vmatpush.msra.mxu0 0.0
    %504 = vmatpush.msra.mxu0 0.0
    %505 = vmatpush.msra.mxu0 0.0
    %506 = vmatpush.msra.mxu0 0.0
    %507 = vmatpush.msra.mxu0 0.0
    %v508 = vand.u32 %v487, 4294901760
    %509 = vmatpush.msra.mxu0 %v508
    %v510 = vand.u32 %v485, 4294901760
    %511 = vmatpush.msra.mxu0 %v510
    %v512 = vand.u32 %v492, 4294901760
    %v513 = vsub.f32 %v492, %v512
    %v514 = vand.u32 %v513, 4294901760
    %v515 = vsub.f32 %v513, %v514
    %v516 = vand.u32 %v515, 4294901760
    %517 = vmatmul.f32.gmra.mxu0 %v516
    %v518 = vpop.f32.mrf.mxu0
    %v519 = vadd.f32 0.0, %v518
    %520 = vdwg.mxu0
    %521 = vmatpush.msra.mxu0 0.0
    %522 = vmatpush.msra.mxu0 0.0
    %523 = vmatpush.msra.mxu0 0.0
    %524 = vmatpush.msra.mxu0 0.0
    %525 = vmatpush.msra.mxu0 0.0
    %526 = vmatpush.msra.mxu0 0.0
    %527 = vmatpush.msra.mxu0 0.0
    %528 = vmatpush.msra.mxu0 0.0
    %529 = vmatpush.msra.mxu0 0.0
    %530 = vmatpush.msra.mxu0 0.0
    %531 = vmatpush.msra.mxu0 0.0
    %532 = vmatpush.msra.mxu0 0.0
    %533 = vmatpush.msra.mxu0 0.0
    %534 = vmatpush.msra.mxu0 0.0
    %v535 = vand.u32 %v487, 4294901760
    %v536 = vsub.f32 %v487, %v535
    %v537 = vand.u32 %v536, 4294901760
    %v538 = vsub.f32 %v536, %v537
    %v539 = vand.u32 %v538, 4294901760
    %540 = vmatpush.msra.mxu0 %v539
    %v541 = vand.u32 %v485, 4294901760
    %v542 = vsub.f32 %v485, %v541
    %v543 = vand.u32 %v542, 4294901760
    %v544 = vsub.f32 %v542, %v543
    %v545 = vand.u32 %v544, 4294901760
    %546 = vmatpush.msra.mxu0 %v545
    %v547 = vand.u32 %v492, 4294901760
    %548 = vmatmul.f32.gmra.mxu0 %v547
    %v549 = vpop.f32.mrf.mxu0
    %v550 = vadd.f32 %v519, %v549
    %551 = vdwg.mxu0
    %552 = vmatpush.msra.mxu0 0.0
    %553 = vmatpush.msra.mxu0 0.0
    %554 = vmatpush.msra.mxu0 0.0
    %555 = vmatpush.msra.mxu0 0.0
    %556 = vmatpush.msra.mxu0 0.0
    %557 = vmatpush.msra.mxu0 0.0
    %558 = vmatpush.msra.mxu0 0.0
    %559 = vmatpush.msra.mxu0 0.0
    %560 = vmatpush.msra.mxu0 0.0
    %561 = vmatpush.msra.mxu0 0.0
    %562 = vmatpush.msra.mxu0 0.0
    %563 = vmatpush.msra.mxu0 0.0
    %564 = vmatpush.msra.mxu0 0.0
    %565 = vmatpush.msra.mxu0 0.0
    %v566 = vand.u32 %v487, 4294901760
    %v567 = vsub.f32 %v487, %v566
    %568 = vmatpush.msra.mxu0 %v567
    %v569 = vand.u32 %v485, 4294901760
    %v570 = vsub.f32 %v485, %v569
    %571 = vmatpush.msra.mxu0 %v570
    %v572 = vand.u32 %v492, 4294901760
    %v573 = vsub.f32 %v492, %v572
    %574 = vmatmul.f32.gmra.mxu0 %v573
    %v575 = vpop.f32.mrf.mxu0
    %v576 = vadd.f32 %v550, %v575
    %577 = vdwg.mxu0
    %578 = vmatpush.msra.mxu0 0.0
    %579 = vmatpush.msra.mxu0 0.0
    %580 = vmatpush.msra.mxu0 0.0
    %581 = vmatpush.msra.mxu0 0.0
    %582 = vmatpush.msra.mxu0 0.0
    %583 = vmatpush.msra.mxu0 0.0
    %584 = vmatpush.msra.mxu0 0.0
    %585 = vmatpush.msra.mxu0 0.0
    %586 = vmatpush.msra.mxu0 0.0
    %587 = vmatpush.msra.mxu0 0.0
    %588 = vmatpush.msra.mxu0 0.0
    %589 = vmatpush.msra.mxu0 0.0
    %590 = vmatpush.msra.mxu0 0.0
    %591 = vmatpush.msra.mxu0 0.0
    %v592 = vand.u32 %v487, 4294901760
    %593 = vmatpush.msra.mxu0 %v592
    %v594 = vand.u32 %v485, 4294901760
    %595 = vmatpush.msra.mxu0 %v594
    %v596 = vand.u32 %v492, 4294901760
    %v597 = vsub.f32 %v492, %v596
    %v598 = vand.u32 %v597, 4294901760
    %599 = vmatmul.f32.gmra.mxu0 %v598
    %v600 = vpop.f32.mrf.mxu0
    %v601 = vadd.f32 %v576, %v600
    %602 = vdwg.mxu0
    %603 = vmatpush.msra.mxu0 0.0
    %604 = vmatpush.msra.mxu0 0.0
    %605 = vmatpush.msra.mxu0 0.0
    %606 = vmatpush.msra.mxu0 0.0
    %607 = vmatpush.msra.mxu0 0.0
    %608 = vmatpush.msra.mxu0 0.0
    %609 = vmatpush.msra.mxu0 0.0
    %610 = vmatpush.msra.mxu0 0.0
    %611 = vmatpush.msra.mxu0 0.0
    %612 = vmatpush.msra.mxu0 0.0
    %613 = vmatpush.msra.mxu0 0.0
    %614 = vmatpush.msra.mxu0 0.0
    %615 = vmatpush.msra.mxu0 0.0
    %616 = vmatpush.msra.mxu0 0.0
    %v617 = vand.u32 %v487, 4294901760
    %v618 = vsub.f32 %v487, %v617
    %v619 = vand.u32 %v618, 4294901760
    %620 = vmatpush.msra.mxu0 %v619
    %v621 = vand.u32 %v485, 4294901760
    %v622 = vsub.f32 %v485, %v621
    %v623 = vand.u32 %v622, 4294901760
    %624 = vmatpush.msra.mxu0 %v623
    %v625 = vand.u32 %v492, 4294901760
    %626 = vmatmul.f32.gmra.mxu0 %v625
    %v627 = vpop.f32.mrf.mxu0
    %v628 = vadd.f32 %v601, %v627
    %629 = vdwg.mxu0
    %630 = vmatpush.msra.mxu0 0.0
    %631 = vmatpush.msra.mxu0 0.0
    %632 = vmatpush.msra.mxu0 0.0
    %633 = vmatpush.msra.mxu0 0.0
    %634 = vmatpush.msra.mxu0 0.0
    %635 = vmatpush.msra.mxu0 0.0
    %636 = vmatpush.msra.mxu0 0.0
    %637 = vmatpush.msra.mxu0 0.0
    %638 = vmatpush.msra.mxu0 0.0
    %639 = vmatpush.msra.mxu0 0.0
    %640 = vmatpush.msra.mxu0 0.0
    %641 = vmatpush.msra.mxu0 0.0
    %642 = vmatpush.msra.mxu0 0.0
    %643 = vmatpush.msra.mxu0 0.0
    %v644 = vand.u32 %v487, 4294901760
    %645 = vmatpush.msra.mxu0 %v644
    %v646 = vand.u32 %v485, 4294901760
    %647 = vmatpush.msra.mxu0 %v646
    %v648 = vand.u32 %v492, 4294901760
    %649 = vmatmul.f32.gmra.mxu0 %v648
    %v650 = vpop.f32.mrf.mxu0
    %v651 = vadd.f32 %v628, %v650
    %652 = vdwg.mxu0
    %v654 = vsel %vm490, %v479, 0
    %656 = vmatpush.msra.mxu0 0.0
    %657 = vmatpush.msra.mxu0 0.0
    %658 = vmatpush.msra.mxu0 0.0
    %659 = vmatpush.msra.mxu0 0.0
    %660 = vmatpush.msra.mxu0 0.0
    %661 = vmatpush.msra.mxu0 0.0
    %662 = vmatpush.msra.mxu0 0.0
    %663 = vmatpush.msra.mxu0 0.0
    %664 = vmatpush.msra.mxu0 0.0
    %665 = vmatpush.msra.mxu0 0.0
    %666 = vmatpush.msra.mxu0 0.0
    %667 = vmatpush.msra.mxu0 0.0
    %668 = vmatpush.msra.mxu0 0.0
    %669 = vmatpush.msra.mxu0 0.0
    %v670 = vand.u32 %v476, 4294901760
    %671 = vmatpush.msra.mxu0 %v670
    %v672 = vand.u32 %v475, 4294901760
    %673 = vmatpush.msra.mxu0 %v672
    %v674 = vand.u32 %v654, 4294901760
    %v675 = vsub.f32 %v654, %v674
    %v676 = vand.u32 %v675, 4294901760
    %v677 = vsub.f32 %v675, %v676
    %v678 = vand.u32 %v677, 4294901760
    %679 = vmatmul.f32.gmra.mxu0 %v678
    %v680 = vpop.f32.mrf.mxu0
    %v681 = vadd.f32 %v651, %v680
    %682 = vdwg.mxu0
    %683 = vmatpush.msra.mxu0 0.0
    %684 = vmatpush.msra.mxu0 0.0
    %685 = vmatpush.msra.mxu0 0.0
    %686 = vmatpush.msra.mxu0 0.0
    %687 = vmatpush.msra.mxu0 0.0
    %688 = vmatpush.msra.mxu0 0.0
    %689 = vmatpush.msra.mxu0 0.0
    %690 = vmatpush.msra.mxu0 0.0
    %691 = vmatpush.msra.mxu0 0.0
    %692 = vmatpush.msra.mxu0 0.0
    %693 = vmatpush.msra.mxu0 0.0
    %694 = vmatpush.msra.mxu0 0.0
    %695 = vmatpush.msra.mxu0 0.0
    %696 = vmatpush.msra.mxu0 0.0
    %v697 = vand.u32 %v476, 4294901760
    %v698 = vsub.f32 %v476, %v697
    %v699 = vand.u32 %v698, 4294901760
    %v700 = vsub.f32 %v698, %v699
    %v701 = vand.u32 %v700, 4294901760
    %702 = vmatpush.msra.mxu0 %v701
    %v703 = vand.u32 %v475, 4294901760
    %v704 = vsub.f32 %v475, %v703
    %v705 = vand.u32 %v704, 4294901760
    %v706 = vsub.f32 %v704, %v705
    %v707 = vand.u32 %v706, 4294901760
    %708 = vmatpush.msra.mxu0 %v707
    %v709 = vand.u32 %v654, 4294901760
    %710 = vmatmul.f32.gmra.mxu0 %v709
    %v711 = vpop.f32.mrf.mxu0
    %v712 = vadd.f32 %v681, %v711
    %713 = vdwg.mxu0
    %714 = vmatpush.msra.mxu0 0.0
    %715 = vmatpush.msra.mxu0 0.0
    %716 = vmatpush.msra.mxu0 0.0
    %717 = vmatpush.msra.mxu0 0.0
    %718 = vmatpush.msra.mxu0 0.0
    %719 = vmatpush.msra.mxu0 0.0
    %720 = vmatpush.msra.mxu0 0.0
    %721 = vmatpush.msra.mxu0 0.0
    %722 = vmatpush.msra.mxu0 0.0
    %723 = vmatpush.msra.mxu0 0.0
    %724 = vmatpush.msra.mxu0 0.0
    %725 = vmatpush.msra.mxu0 0.0
    %726 = vmatpush.msra.mxu0 0.0
    %727 = vmatpush.msra.mxu0 0.0
    %v728 = vand.u32 %v476, 4294901760
    %v729 = vsub.f32 %v476, %v728
    %730 = vmatpush.msra.mxu0 %v729
    %v731 = vand.u32 %v475, 4294901760
    %v732 = vsub.f32 %v475, %v731
    %733 = vmatpush.msra.mxu0 %v732
    %v734 = vand.u32 %v654, 4294901760
    %v735 = vsub.f32 %v654, %v734
    %736 = vmatmul.f32.gmra.mxu0 %v735
    %v737 = vpop.f32.mrf.mxu0
    %v738 = vadd.f32 %v712, %v737
    %739 = vdwg.mxu0
    %740 = vmatpush.msra.mxu0 0.0
    %741 = vmatpush.msra.mxu0 0.0
    %742 = vmatpush.msra.mxu0 0.0
    %743 = vmatpush.msra.mxu0 0.0
    %744 = vmatpush.msra.mxu0 0.0
    %745 = vmatpush.msra.mxu0 0.0
    %746 = vmatpush.msra.mxu0 0.0
    %747 = vmatpush.msra.mxu0 0.0
    %748 = vmatpush.msra.mxu0 0.0
    %749 = vmatpush.msra.mxu0 0.0
    %750 = vmatpush.msra.mxu0 0.0
    %751 = vmatpush.msra.mxu0 0.0
    %752 = vmatpush.msra.mxu0 0.0
    %753 = vmatpush.msra.mxu0 0.0
    %v754 = vand.u32 %v476, 4294901760
    %755 = vmatpush.msra.mxu0 %v754
    %v756 = vand.u32 %v475, 4294901760
    %757 = vmatpush.msra.mxu0 %v756
    %v758 = vand.u32 %v654, 4294901760
    %v759 = vsub.f32 %v654, %v758
    %v760 = vand.u32 %v759, 4294901760
    %761 = vmatmul.f32.gmra.mxu0 %v760
    %v762 = vpop.f32.mrf.mxu0
    %v763 = vadd.f32 %v738, %v762
    %764 = vdwg.mxu0
    %765 = vmatpush.msra.mxu0 0.0
    %766 = vmatpush.msra.mxu0 0.0
    %767 = vmatpush.msra.mxu0 0.0
    %768 = vmatpush.msra.mxu0 0.0
    %769 = vmatpush.msra.mxu0 0.0
    %770 = vmatpush.msra.mxu0 0.0
    %771 = vmatpush.msra.mxu0 0.0
    %772 = vmatpush.msra.mxu0 0.0
    %773 = vmatpush.msra.mxu0 0.0
    %774 = vmatpush.msra.mxu0 0.0
    %775 = vmatpush.msra.mxu0 0.0
    %776 = vmatpush.msra.mxu0 0.0
    %777 = vmatpush.msra.mxu0 0.0
    %778 = vmatpush.msra.mxu0 0.0
    %v779 = vand.u32 %v476, 4294901760
    %v780 = vsub.f32 %v476, %v779
    %v781 = vand.u32 %v780, 4294901760
    %782 = vmatpush.msra.mxu0 %v781
    %v783 = vand.u32 %v475, 4294901760
    %v784 = vsub.f32 %v475, %v783
    %v785 = vand.u32 %v784, 4294901760
    %786 = vmatpush.msra.mxu0 %v785
    %v787 = vand.u32 %v654, 4294901760
    %788 = vmatmul.f32.gmra.mxu0 %v787
    %v789 = vpop.f32.mrf.mxu0
    %v790 = vadd.f32 %v763, %v789
    %791 = vdwg.mxu0
    %792 = vmatpush.msra.mxu0 0.0
    %793 = vmatpush.msra.mxu0 0.0
    %794 = vmatpush.msra.mxu0 0.0
    %795 = vmatpush.msra.mxu0 0.0
    %796 = vmatpush.msra.mxu0 0.0
    %797 = vmatpush.msra.mxu0 0.0
    %798 = vmatpush.msra.mxu0 0.0
    %799 = vmatpush.msra.mxu0 0.0
    %800 = vmatpush.msra.mxu0 0.0
    %801 = vmatpush.msra.mxu0 0.0
    %802 = vmatpush.msra.mxu0 0.0
    %803 = vmatpush.msra.mxu0 0.0
    %804 = vmatpush.msra.mxu0 0.0
    %805 = vmatpush.msra.mxu0 0.0
    %v806 = vand.u32 %v476, 4294901760
    %807 = vmatpush.msra.mxu0 %v806
    %v808 = vand.u32 %v475, 4294901760
    %809 = vmatpush.msra.mxu0 %v808
    %v810 = vand.u32 %v654, 4294901760
    %811 = vmatmul.f32.gmra.mxu0 %v810
    %v812 = vpop.f32.mrf.mxu0
    %v813 = vadd.f32 %v790, %v812
    %814 = vdwg.mxu0
    %v815 = vmax.f32 %v813, 0.0
    %v816 = vld [vmem:[%s4] sm:$0xff]
    %v817 = vld [vmem:[%s4 + $0x8] sm:$0xff]
    %vm818 = vcmask 15360
    %v820 = vsel %vm818, %v816, 0
    %v823 = vsel %vm818, %v817, 0
    %vm825 = vcmask 1041408
    %v827 = vsel %vm825, %v815, 0
    %829 = vmatpush.msra.mxu0 0.0
    %830 = vmatpush.msra.mxu0 0.0
    %831 = vmatpush.msra.mxu0 0.0
    %832 = vmatpush.msra.mxu0 0.0
    %833 = vmatpush.msra.mxu0 0.0
    %834 = vmatpush.msra.mxu0 0.0
    %835 = vmatpush.msra.mxu0 0.0
    %836 = vmatpush.msra.mxu0 0.0
    %837 = vmatpush.msra.mxu0 0.0
    %838 = vmatpush.msra.mxu0 0.0
    %839 = vmatpush.msra.mxu0 0.0
    %840 = vmatpush.msra.mxu0 0.0
    %841 = vmatpush.msra.mxu0 0.0
    %842 = vmatpush.msra.mxu0 0.0
    %843 = vmatpush.msra.mxu0 0.0
    %v844 = vand.u32 %v827, 4294901760
    %845 = vmatpush.msra.mxu0 %v844
    %v846 = vand.u32 %v820, 4294901760
    %v847 = vsub.f32 %v820, %v846
    %v848 = vand.u32 %v847, 4294901760
    %v849 = vsub.f32 %v847, %v848
    %v850 = vand.u32 %v849, 4294901760
    %851 = vmatmul.f32.gmra.mxu0 %v850
    %v852 = vpop.f32.mrf.mxu0
    %v853 = vadd.f32 0.0, %v852
    %v854 = vand.u32 %v823, 4294901760
    %v855 = vsub.f32 %v823, %v854
    %v856 = vand.u32 %v855, 4294901760
    %v857 = vsub.f32 %v855, %v856
    %v858 = vand.u32 %v857, 4294901760
    %859 = vmatmul.f32.gmra.mxu0 %v858
    %v860 = vpop.f32.mrf.mxu0
    %v861 = vadd.f32 0.0, %v860
    %862 = vdwg.mxu0
    %863 = vmatpush.msra.mxu0 0.0
    %864 = vmatpush.msra.mxu0 0.0
    %865 = vmatpush.msra.mxu0 0.0
    %866 = vmatpush.msra.mxu0 0.0
    %867 = vmatpush.msra.mxu0 0.0
    %868 = vmatpush.msra.mxu0 0.0
    %869 = vmatpush.msra.mxu0 0.0
    %870 = vmatpush.msra.mxu0 0.0
    %871 = vmatpush.msra.mxu0 0.0
    %872 = vmatpush.msra.mxu0 0.0
    %873 = vmatpush.msra.mxu0 0.0
    %874 = vmatpush.msra.mxu0 0.0
    %875 = vmatpush.msra.mxu0 0.0
    %876 = vmatpush.msra.mxu0 0.0
    %877 = vmatpush.msra.mxu0 0.0
    %v878 = vand.u32 %v827, 4294901760
    %v879 = vsub.f32 %v827, %v878
    %v880 = vand.u32 %v879, 4294901760
    %v881 = vsub.f32 %v879, %v880
    %v882 = vand.u32 %v881, 4294901760
    %883 = vmatpush.msra.mxu0 %v882
    %v884 = vand.u32 %v820, 4294901760
    %885 = vmatmul.f32.gmra.mxu0 %v884
    %v886 = vpop.f32.mrf.mxu0
    %v887 = vadd.f32 %v853, %v886
    %v888 = vand.u32 %v823, 4294901760
    %889 = vmatmul.f32.gmra.mxu0 %v888
    %v890 = vpop.f32.mrf.mxu0
    %v891 = vadd.f32 %v861, %v890
    %892 = vdwg.mxu0
    %893 = vmatpush.msra.mxu0 0.0
    %894 = vmatpush.msra.mxu0 0.0
    %895 = vmatpush.msra.mxu0 0.0
    %896 = vmatpush.msra.mxu0 0.0
    %897 = vmatpush.msra.mxu0 0.0
    %898 = vmatpush.msra.mxu0 0.0
    %899 = vmatpush.msra.mxu0 0.0
    %900 = vmatpush.msra.mxu0 0.0
    %901 = vmatpush.msra.mxu0 0.0
    %902 = vmatpush.msra.mxu0 0.0
    %903 = vmatpush.msra.mxu0 0.0
    %904 = vmatpush.msra.mxu0 0.0
    %905 = vmatpush.msra.mxu0 0.0
    %906 = vmatpush.msra.mxu0 0.0
    %907 = vmatpush.msra.mxu0 0.0
    %v908 = vand.u32 %v827, 4294901760
    %v909 = vsub.f32 %v827, %v908
    %910 = vmatpush.msra.mxu0 %v909
    %v911 = vand.u32 %v820, 4294901760
    %v912 = vsub.f32 %v820, %v911
    %913 = vmatmul.f32.gmra.mxu0 %v912
    %v914 = vpop.f32.mrf.mxu0
    %v915 = vadd.f32 %v887, %v914
    %v916 = vand.u32 %v823, 4294901760
    %v917 = vsub.f32 %v823, %v916
    %918 = vmatmul.f32.gmra.mxu0 %v917
    %v919 = vpop.f32.mrf.mxu0
    %v920 = vadd.f32 %v891, %v919
    %921 = vdwg.mxu0
    %922 = vmatpush.msra.mxu0 0.0
    %923 = vmatpush.msra.mxu0 0.0
    %924 = vmatpush.msra.mxu0 0.0
    %925 = vmatpush.msra.mxu0 0.0
    %926 = vmatpush.msra.mxu0 0.0
    %927 = vmatpush.msra.mxu0 0.0
    %928 = vmatpush.msra.mxu0 0.0
    %929 = vmatpush.msra.mxu0 0.0
    %930 = vmatpush.msra.mxu0 0.0
    %931 = vmatpush.msra.mxu0 0.0
    %932 = vmatpush.msra.mxu0 0.0
    %933 = vmatpush.msra.mxu0 0.0
    %934 = vmatpush.msra.mxu0 0.0
    %935 = vmatpush.msra.mxu0 0.0
    %936 = vmatpush.msra.mxu0 0.0
    %v937 = vand.u32 %v827, 4294901760
    %938 = vmatpush.msra.mxu0 %v937
    %v939 = vand.u32 %v820, 4294901760
    %v940 = vsub.f32 %v820, %v939
    %v941 = vand.u32 %v940, 4294901760
    %942 = vmatmul.f32.gmra.mxu0 %v941
    %v943 = vpop.f32.mrf.mxu0
    %v944 = vadd.f32 %v915, %v943
    %v945 = vand.u32 %v823, 4294901760
    %v946 = vsub.f32 %v823, %v945
    %v947 = vand.u32 %v946, 4294901760
    %948 = vmatmul.f32.gmra.mxu0 %v947
    %v949 = vpop.f32.mrf.mxu0
    %v950 = vadd.f32 %v920, %v949
    %951 = vdwg.mxu0
    %952 = vmatpush.msra.mxu0 0.0
    %953 = vmatpush.msra.mxu0 0.0
    %954 = vmatpush.msra.mxu0 0.0
    %955 = vmatpush.msra.mxu0 0.0
    %956 = vmatpush.msra.mxu0 0.0
    %957 = vmatpush.msra.mxu0 0.0
    %958 = vmatpush.msra.mxu0 0.0
    %959 = vmatpush.msra.mxu0 0.0
    %960 = vmatpush.msra.mxu0 0.0
    %961 = vmatpush.msra.mxu0 0.0
    %962 = vmatpush.msra.mxu0 0.0
    %963 = vmatpush.msra.mxu0 0.0
    %964 = vmatpush.msra.mxu0 0.0
    %965 = vmatpush.msra.mxu0 0.0
    %966 = vmatpush.msra.mxu0 0.0
    %v967 = vand.u32 %v827, 4294901760
    %v968 = vsub.f32 %v827, %v967
    %v969 = vand.u32 %v968, 4294901760
    %970 = vmatpush.msra.mxu0 %v969
    %v971 = vand.u32 %v820, 4294901760
    %972 = vmatmul.f32.gmra.mxu0 %v971
    %v973 = vpop.f32.mrf.mxu0
    %v974 = vadd.f32 %v944, %v973
    %v975 = vand.u32 %v823, 4294901760
    %976 = vmatmul.f32.gmra.mxu0 %v975
    %v977 = vpop.f32.mrf.mxu0
    %v978 = vadd.f32 %v950, %v977
    %979 = vdwg.mxu0
    %980 = vmatpush.msra.mxu0 0.0
    %981 = vmatpush.msra.mxu0 0.0
    %982 = vmatpush.msra.mxu0 0.0
    %983 = vmatpush.msra.mxu0 0.0
    %984 = vmatpush.msra.mxu0 0.0
    %985 = vmatpush.msra.mxu0 0.0
    %986 = vmatpush.msra.mxu0 0.0
    %987 = vmatpush.msra.mxu0 0.0
    %988 = vmatpush.msra.mxu0 0.0
    %989 = vmatpush.msra.mxu0 0.0
    %990 = vmatpush.msra.mxu0 0.0
    %991 = vmatpush.msra.mxu0 0.0
    %992 = vmatpush.msra.mxu0 0.0
    %993 = vmatpush.msra.mxu0 0.0
    %994 = vmatpush.msra.mxu0 0.0
    %v995 = vand.u32 %v827, 4294901760
    %996 = vmatpush.msra.mxu0 %v995
    %v997 = vand.u32 %v820, 4294901760
    %998 = vmatmul.f32.gmra.mxu0 %v997
    %v999 = vpop.f32.mrf.mxu0
    %v1000 = vadd.f32 %v974, %v999
    %v1001 = vand.u32 %v823, 4294901760
    %1002 = vmatmul.f32.gmra.mxu0 %v1001
    %v1003 = vpop.f32.mrf.mxu0
    %v1004 = vadd.f32 %v978, %v1003
    %1005 = vdwg.mxu0
    %v1006 = vxor.u32 %v1000, 2147483648
    %v1007 = vxor.u32 %v1004, 2147483648
    %v1008 = vmul.f32 %v1006, 1.442695
    %v1009 = vpow.pop %v1008
    %v1010 = vmul.f32 %v1007, 1.442695
    %v1011 = vpow.pop %v1010
    %v1012 = vadd.f32 %v1009, 1.0
    %v1013 = vadd.f32 %v1011, 1.0
    %v1014 = vrcp.pop %v1012
    %v1015 = vmul.f32 %v1012, %v1014
    %v1016 = vsub.f32 1.0, %v1015
    %v1017 = vmul.f32 %v1014, %v1016
    %v1018 = vadd.f32 %v1014, %v1017
    %vm1019 = vweird.f32 %v1012
    %vm1020 = vweird.f32 %v1014
    %vm1021 = vmor %vm1019, %vm1020
    %v1022 = vsel %vm1021, %v1014, %v1018
    %v1023 = vand.u32 2147483647, %v1012
    %vm1024 = vcmp.eq.f32.partialorder %v1023, 8.507059e+37
    %v1025 = vand.u32 %v1012, 2147483648
    %v1026 = vor.u32 1.1754944e-38, %v1025
    %v1027 = vsel %vm1024, %v1026, %v1022
    %v1028 = vmul.f32 1.0, %v1027
    %v1029 = vrcp.pop %v1013
    %v1030 = vmul.f32 %v1013, %v1029
    %v1031 = vsub.f32 1.0, %v1030
    %v1032 = vmul.f32 %v1029, %v1031
    %v1033 = vadd.f32 %v1029, %v1032
    %vm1034 = vweird.f32 %v1013
    %vm1035 = vweird.f32 %v1029
    %vm1036 = vmor %vm1034, %vm1035
    %v1037 = vsel %vm1036, %v1029, %v1033
    %v1038 = vand.u32 2147483647, %v1013
    %vm1039 = vcmp.eq.f32.partialorder %v1038, 8.507059e+37
    %v1040 = vand.u32 %v1013, 2147483648
    %v1041 = vor.u32 1.1754944e-38, %v1040
    %v1042 = vsel %vm1039, %v1041, %v1037
    %v1043 = vmul.f32 1.0, %v1042
    %s1044 = scalar_lea.vmem %s4, 16
    %v1045 = vld [vmem:[%s1044] sm:$0xff]
    %v1046 = vld [vmem:[%s1044 + $0x8] sm:$0xff]
    %v1048 = vsel %vm818, %v1045, 0
    %v1051 = vsel %vm818, %v1046, 0
    %1053 = vmatpush.msra.mxu0 0.0
    %1054 = vmatpush.msra.mxu0 0.0
    %1055 = vmatpush.msra.mxu0 0.0
    %1056 = vmatpush.msra.mxu0 0.0
    %1057 = vmatpush.msra.mxu0 0.0
    %1058 = vmatpush.msra.mxu0 0.0
    %1059 = vmatpush.msra.mxu0 0.0
    %1060 = vmatpush.msra.mxu0 0.0
    %1061 = vmatpush.msra.mxu0 0.0
    %1062 = vmatpush.msra.mxu0 0.0
    %1063 = vmatpush.msra.mxu0 0.0
    %1064 = vmatpush.msra.mxu0 0.0
    %1065 = vmatpush.msra.mxu0 0.0
    %1066 = vmatpush.msra.mxu0 0.0
    %1067 = vmatpush.msra.mxu0 0.0
    %v1068 = vand.u32 %v827, 4294901760
    %1069 = vmatpush.msra.mxu0 %v1068
    %v1070 = vand.u32 %v1048, 4294901760
    %v1071 = vsub.f32 %v1048, %v1070
    %v1072 = vand.u32 %v1071, 4294901760
    %v1073 = vsub.f32 %v1071, %v1072
    %v1074 = vand.u32 %v1073, 4294901760
    %1075 = vmatmul.f32.gmra.mxu0 %v1074
    %v1076 = vpop.f32.mrf.mxu0
    %v1077 = vadd.f32 0.0, %v1076
    %v1078 = vand.u32 %v1051, 4294901760
    %v1079 = vsub.f32 %v1051, %v1078
    %v1080 = vand.u32 %v1079, 4294901760
    %v1081 = vsub.f32 %v1079, %v1080
    %v1082 = vand.u32 %v1081, 4294901760
    %1083 = vmatmul.f32.gmra.mxu0 %v1082
    %v1084 = vpop.f32.mrf.mxu0
    %v1085 = vadd.f32 0.0, %v1084
    %1086 = vdwg.mxu0
    %1087 = vmatpush.msra.mxu0 0.0
    %1088 = vmatpush.msra.mxu0 0.0
    %1089 = vmatpush.msra.mxu0 0.0
    %1090 = vmatpush.msra.mxu0 0.0
    %1091 = vmatpush.msra.mxu0 0.0
    %1092 = vmatpush.msra.mxu0 0.0
    %1093 = vmatpush.msra.mxu0 0.0
    %1094 = vmatpush.msra.mxu0 0.0
    %1095 = vmatpush.msra.mxu0 0.0
    %1096 = vmatpush.msra.mxu0 0.0
    %1097 = vmatpush.msra.mxu0 0.0
    %1098 = vmatpush.msra.mxu0 0.0
    %1099 = vmatpush.msra.mxu0 0.0
    %1100 = vmatpush.msra.mxu0 0.0
    %1101 = vmatpush.msra.mxu0 0.0
    %v1102 = vand.u32 %v827, 4294901760
    %v1103 = vsub.f32 %v827, %v1102
    %v1104 = vand.u32 %v1103, 4294901760
    %v1105 = vsub.f32 %v1103, %v1104
    %v1106 = vand.u32 %v1105, 4294901760
    %1107 = vmatpush.msra.mxu0 %v1106
    %v1108 = vand.u32 %v1048, 4294901760
    %1109 = vmatmul.f32.gmra.mxu0 %v1108
    %v1110 = vpop.f32.mrf.mxu0
    %v1111 = vadd.f32 %v1077, %v1110
    %v1112 = vand.u32 %v1051, 4294901760
    %1113 = vmatmul.f32.gmra.mxu0 %v1112
    %v1114 = vpop.f32.mrf.mxu0
    %v1115 = vadd.f32 %v1085, %v1114
    %1116 = vdwg.mxu0
    %1117 = vmatpush.msra.mxu0 0.0
    %1118 = vmatpush.msra.mxu0 0.0
    %1119 = vmatpush.msra.mxu0 0.0
    %1120 = vmatpush.msra.mxu0 0.0
    %1121 = vmatpush.msra.mxu0 0.0
    %1122 = vmatpush.msra.mxu0 0.0
    %1123 = vmatpush.msra.mxu0 0.0
    %1124 = vmatpush.msra.mxu0 0.0
    %1125 = vmatpush.msra.mxu0 0.0
    %1126 = vmatpush.msra.mxu0 0.0
    %1127 = vmatpush.msra.mxu0 0.0
    %1128 = vmatpush.msra.mxu0 0.0
    %1129 = vmatpush.msra.mxu0 0.0
    %1130 = vmatpush.msra.mxu0 0.0
    %1131 = vmatpush.msra.mxu0 0.0
    %v1132 = vand.u32 %v827, 4294901760
    %v1133 = vsub.f32 %v827, %v1132
    %1134 = vmatpush.msra.mxu0 %v1133
    %v1135 = vand.u32 %v1048, 4294901760
    %v1136 = vsub.f32 %v1048, %v1135
    %1137 = vmatmul.f32.gmra.mxu0 %v1136
    %v1138 = vpop.f32.mrf.mxu0
    %v1139 = vadd.f32 %v1111, %v1138
    %v1140 = vand.u32 %v1051, 4294901760
    %v1141 = vsub.f32 %v1051, %v1140
    %1142 = vmatmul.f32.gmra.mxu0 %v1141
    %v1143 = vpop.f32.mrf.mxu0
    %v1144 = vadd.f32 %v1115, %v1143
    %1145 = vdwg.mxu0
    %1146 = vmatpush.msra.mxu0 0.0
    %1147 = vmatpush.msra.mxu0 0.0
    %1148 = vmatpush.msra.mxu0 0.0
    %1149 = vmatpush.msra.mxu0 0.0
    %1150 = vmatpush.msra.mxu0 0.0
    %1151 = vmatpush.msra.mxu0 0.0
    %1152 = vmatpush.msra.mxu0 0.0
    %1153 = vmatpush.msra.mxu0 0.0
    %1154 = vmatpush.msra.mxu0 0.0
    %1155 = vmatpush.msra.mxu0 0.0
    %1156 = vmatpush.msra.mxu0 0.0
    %1157 = vmatpush.msra.mxu0 0.0
    %1158 = vmatpush.msra.mxu0 0.0
    %1159 = vmatpush.msra.mxu0 0.0
    %1160 = vmatpush.msra.mxu0 0.0
    %v1161 = vand.u32 %v827, 4294901760
    %1162 = vmatpush.msra.mxu0 %v1161
    %v1163 = vand.u32 %v1048, 4294901760
    %v1164 = vsub.f32 %v1048, %v1163
    %v1165 = vand.u32 %v1164, 4294901760
    %1166 = vmatmul.f32.gmra.mxu0 %v1165
    %v1167 = vpop.f32.mrf.mxu0
    %v1168 = vadd.f32 %v1139, %v1167
    %v1169 = vand.u32 %v1051, 4294901760
    %v1170 = vsub.f32 %v1051, %v1169
    %v1171 = vand.u32 %v1170, 4294901760
    %1172 = vmatmul.f32.gmra.mxu0 %v1171
    %v1173 = vpop.f32.mrf.mxu0
    %v1174 = vadd.f32 %v1144, %v1173
    %1175 = vdwg.mxu0
    %1176 = vmatpush.msra.mxu0 0.0
    %1177 = vmatpush.msra.mxu0 0.0
    %1178 = vmatpush.msra.mxu0 0.0
    %1179 = vmatpush.msra.mxu0 0.0
    %1180 = vmatpush.msra.mxu0 0.0
    %1181 = vmatpush.msra.mxu0 0.0
    %1182 = vmatpush.msra.mxu0 0.0
    %1183 = vmatpush.msra.mxu0 0.0
    %1184 = vmatpush.msra.mxu0 0.0
    %1185 = vmatpush.msra.mxu0 0.0
    %1186 = vmatpush.msra.mxu0 0.0
    %1187 = vmatpush.msra.mxu0 0.0
    %1188 = vmatpush.msra.mxu0 0.0
    %1189 = vmatpush.msra.mxu0 0.0
    %1190 = vmatpush.msra.mxu0 0.0
    %v1191 = vand.u32 %v827, 4294901760
    %v1192 = vsub.f32 %v827, %v1191
    %v1193 = vand.u32 %v1192, 4294901760
    %1194 = vmatpush.msra.mxu0 %v1193
    %v1195 = vand.u32 %v1048, 4294901760
    %1196 = vmatmul.f32.gmra.mxu0 %v1195
    %v1197 = vpop.f32.mrf.mxu0
    %v1198 = vadd.f32 %v1168, %v1197
    %v1199 = vand.u32 %v1051, 4294901760
    %1200 = vmatmul.f32.gmra.mxu0 %v1199
    %v1201 = vpop.f32.mrf.mxu0
    %v1202 = vadd.f32 %v1174, %v1201
    %1203 = vdwg.mxu0
    %1204 = vmatpush.msra.mxu0 0.0
    %1205 = vmatpush.msra.mxu0 0.0
    %1206 = vmatpush.msra.mxu0 0.0
    %1207 = vmatpush.msra.mxu0 0.0
    %1208 = vmatpush.msra.mxu0 0.0
    %1209 = vmatpush.msra.mxu0 0.0
    %1210 = vmatpush.msra.mxu0 0.0
    %1211 = vmatpush.msra.mxu0 0.0
    %1212 = vmatpush.msra.mxu0 0.0
    %1213 = vmatpush.msra.mxu0 0.0
    %1214 = vmatpush.msra.mxu0 0.0
    %1215 = vmatpush.msra.mxu0 0.0
    %1216 = vmatpush.msra.mxu0 0.0
    %1217 = vmatpush.msra.mxu0 0.0
    %1218 = vmatpush.msra.mxu0 0.0
    %v1219 = vand.u32 %v827, 4294901760
    %1220 = vmatpush.msra.mxu0 %v1219
    %v1221 = vand.u32 %v1048, 4294901760
    %1222 = vmatmul.f32.gmra.mxu0 %v1221
    %v1223 = vpop.f32.mrf.mxu0
    %v1224 = vadd.f32 %v1198, %v1223
    %v1225 = vand.u32 %v1051, 4294901760
    %1226 = vmatmul.f32.gmra.mxu0 %v1225
    %v1227 = vpop.f32.mrf.mxu0
    %v1228 = vadd.f32 %v1202, %v1227
    %1229 = vdwg.mxu0
    %v1230 = vxor.u32 %v1224, 2147483648
    %v1231 = vxor.u32 %v1228, 2147483648
    %v1232 = vmul.f32 %v1230, 1.442695
    %v1233 = vpow.pop %v1232
    %v1234 = vmul.f32 %v1231, 1.442695
    %v1235 = vpow.pop %v1234
    %v1236 = vadd.f32 %v1233, 1.0
    %v1237 = vadd.f32 %v1235, 1.0
    %v1238 = vrcp.pop %v1236
    %v1239 = vmul.f32 %v1236, %v1238
    %v1240 = vsub.f32 1.0, %v1239
    %v1241 = vmul.f32 %v1238, %v1240
    %v1242 = vadd.f32 %v1238, %v1241
    %vm1243 = vweird.f32 %v1236
    %vm1244 = vweird.f32 %v1238
    %vm1245 = vmor %vm1243, %vm1244
    %v1246 = vsel %vm1245, %v1238, %v1242
    %v1247 = vand.u32 2147483647, %v1236
    %vm1248 = vcmp.eq.f32.partialorder %v1247, 8.507059e+37
    %v1249 = vand.u32 %v1236, 2147483648
    %v1250 = vor.u32 1.1754944e-38, %v1249
    %v1251 = vsel %vm1248, %v1250, %v1246
    %v1252 = vmul.f32 1.0, %v1251
    %v1253 = vrcp.pop %v1237
    %v1254 = vmul.f32 %v1237, %v1253
    %v1255 = vsub.f32 1.0, %v1254
    %v1256 = vmul.f32 %v1253, %v1255
    %v1257 = vadd.f32 %v1253, %v1256
    %vm1258 = vweird.f32 %v1237
    %vm1259 = vweird.f32 %v1253
    %vm1260 = vmor %vm1258, %vm1259
    %v1261 = vsel %vm1260, %v1253, %v1257
    %v1262 = vand.u32 2147483647, %v1237
    %vm1263 = vcmp.eq.f32.partialorder %v1262, 8.507059e+37
    %v1264 = vand.u32 %v1237, 2147483648
    %v1265 = vor.u32 1.1754944e-38, %v1264
    %v1266 = vsel %vm1263, %v1265, %v1261
    %v1267 = vmul.f32 1.0, %v1266
    %1270 = vrot.lane.b32.xlu0 %v1252, 1
    %v1271 = vpop.permute.xlu0 %1270
    %1272 = vrot.lane.b32.xlu0 %v1267, 1
    %v1273 = vpop.permute.xlu0 %1272
    %vm1276 = vcmask 7168
    %v1277 = vsel %vm1276, %v1028, %v1271
    %v1278 = vsel %vm1276, %v1043, %v1273
    %1281 = vrot.lane.b32.xlu0 %v477, 127
    %v1282 = vpop.permute.xlu0 %1281
    %1283 = vrot.lane.b32.xlu0 %v478, 127
    %v1284 = vpop.permute.xlu0 %1283
    %1287 = vmatpush.msra.mxu0 0.0
    %1288 = vmatpush.msra.mxu0 0.0
    %1289 = vmatpush.msra.mxu0 0.0
    %1290 = vmatpush.msra.mxu0 0.0
    %1291 = vmatpush.msra.mxu0 0.0
    %1292 = vmatpush.msra.mxu0 0.0
    %1293 = vmatpush.msra.mxu0 0.0
    %1294 = vmatpush.msra.mxu0 0.0
    %1295 = vmatpush.msra.mxu0 0.0
    %1296 = vmatpush.msra.mxu0 0.0
    %1297 = vmatpush.msra.mxu0 0.0
    %1298 = vmatpush.msra.mxu0 0.0
    %1299 = vmatpush.msra.mxu0 0.0
    %1300 = vmatpush.msra.mxu0 0.0
    %v1301 = vand.u32 %v1284, 4294901760
    %1302 = vmatpush.msra.mxu0 %v1301
    %v1303 = vand.u32 %v1282, 4294901760
    %1304 = vmatpush.msra.mxu0 %v1303
    %v1305 = vand.u32 %v492, 4294901760
    %v1306 = vsub.f32 %v492, %v1305
    %v1307 = vand.u32 %v1306, 4294901760
    %v1308 = vsub.f32 %v1306, %v1307
    %v1309 = vand.u32 %v1308, 4294901760
    %1310 = vmatmul.f32.gmra.mxu0 %v1309
    %v1311 = vpop.f32.mrf.mxu0
    %v1312 = vadd.f32 0.0, %v1311
    %1313 = vdwg.mxu0
    %1314 = vmatpush.msra.mxu0 0.0
    %1315 = vmatpush.msra.mxu0 0.0
    %1316 = vmatpush.msra.mxu0 0.0
    %1317 = vmatpush.msra.mxu0 0.0
    %1318 = vmatpush.msra.mxu0 0.0
    %1319 = vmatpush.msra.mxu0 0.0
    %1320 = vmatpush.msra.mxu0 0.0
    %1321 = vmatpush.msra.mxu0 0.0
    %1322 = vmatpush.msra.mxu0 0.0
    %1323 = vmatpush.msra.mxu0 0.0
    %1324 = vmatpush.msra.mxu0 0.0
    %1325 = vmatpush.msra.mxu0 0.0
    %1326 = vmatpush.msra.mxu0 0.0
    %1327 = vmatpush.msra.mxu0 0.0
    %v1328 = vand.u32 %v1284, 4294901760
    %v1329 = vsub.f32 %v1284, %v1328
    %v1330 = vand.u32 %v1329, 4294901760
    %v1331 = vsub.f32 %v1329, %v1330
    %v1332 = vand.u32 %v1331, 4294901760
    %1333 = vmatpush.msra.mxu0 %v1332
    %v1334 = vand.u32 %v1282, 4294901760
    %v1335 = vsub.f32 %v1282, %v1334
    %v1336 = vand.u32 %v1335, 4294901760
    %v1337 = vsub.f32 %v1335, %v1336
    %v1338 = vand.u32 %v1337, 4294901760
    %1339 = vmatpush.msra.mxu0 %v1338
    %v1340 = vand.u32 %v492, 4294901760
    %1341 = vmatmul.f32.gmra.mxu0 %v1340
    %v1342 = vpop.f32.mrf.mxu0
    %v1343 = vadd.f32 %v1312, %v1342
    %1344 = vdwg.mxu0
    %1345 = vmatpush.msra.mxu0 0.0
    %1346 = vmatpush.msra.mxu0 0.0
    %1347 = vmatpush.msra.mxu0 0.0
    %1348 = vmatpush.msra.mxu0 0.0
    %1349 = vmatpush.msra.mxu0 0.0
    %1350 = vmatpush.msra.mxu0 0.0
    %1351 = vmatpush.msra.mxu0 0.0
    %1352 = vmatpush.msra.mxu0 0.0
    %1353 = vmatpush.msra.mxu0 0.0
    %1354 = vmatpush.msra.mxu0 0.0
    %1355 = vmatpush.msra.mxu0 0.0
    %1356 = vmatpush.msra.mxu0 0.0
    %1357 = vmatpush.msra.mxu0 0.0
    %1358 = vmatpush.msra.mxu0 0.0
    %v1359 = vand.u32 %v1284, 4294901760
    %v1360 = vsub.f32 %v1284, %v1359
    %1361 = vmatpush.msra.mxu0 %v1360
    %v1362 = vand.u32 %v1282, 4294901760
    %v1363 = vsub.f32 %v1282, %v1362
    %1364 = vmatpush.msra.mxu0 %v1363
    %v1365 = vand.u32 %v492, 4294901760
    %v1366 = vsub.f32 %v492, %v1365
    %1367 = vmatmul.f32.gmra.mxu0 %v1366
    %v1368 = vpop.f32.mrf.mxu0
    %v1369 = vadd.f32 %v1343, %v1368
    %1370 = vdwg.mxu0
    %1371 = vmatpush.msra.mxu0 0.0
    %1372 = vmatpush.msra.mxu0 0.0
    %1373 = vmatpush.msra.mxu0 0.0
    %1374 = vmatpush.msra.mxu0 0.0
    %1375 = vmatpush.msra.mxu0 0.0
    %1376 = vmatpush.msra.mxu0 0.0
    %1377 = vmatpush.msra.mxu0 0.0
    %1378 = vmatpush.msra.mxu0 0.0
    %1379 = vmatpush.msra.mxu0 0.0
    %1380 = vmatpush.msra.mxu0 0.0
    %1381 = vmatpush.msra.mxu0 0.0
    %1382 = vmatpush.msra.mxu0 0.0
    %1383 = vmatpush.msra.mxu0 0.0
    %1384 = vmatpush.msra.mxu0 0.0
    %v1385 = vand.u32 %v1284, 4294901760
    %1386 = vmatpush.msra.mxu0 %v1385
    %v1387 = vand.u32 %v1282, 4294901760
    %1388 = vmatpush.msra.mxu0 %v1387
    %v1389 = vand.u32 %v492, 4294901760
    %v1390 = vsub.f32 %v492, %v1389
    %v1391 = vand.u32 %v1390, 4294901760
    %1392 = vmatmul.f32.gmra.mxu0 %v1391
    %v1393 = vpop.f32.mrf.mxu0
    %v1394 = vadd.f32 %v1369, %v1393
    %1395 = vdwg.mxu0
    %1396 = vmatpush.msra.mxu0 0.0
    %1397 = vmatpush.msra.mxu0 0.0
    %1398 = vmatpush.msra.mxu0 0.0
    %1399 = vmatpush.msra.mxu0 0.0
    %1400 = vmatpush.msra.mxu0 0.0
    %1401 = vmatpush.msra.mxu0 0.0
    %1402 = vmatpush.msra.mxu0 0.0
    %1403 = vmatpush.msra.mxu0 0.0
    %1404 = vmatpush.msra.mxu0 0.0
    %1405 = vmatpush.msra.mxu0 0.0
    %1406 = vmatpush.msra.mxu0 0.0
    %1407 = vmatpush.msra.mxu0 0.0
    %1408 = vmatpush.msra.mxu0 0.0
    %1409 = vmatpush.msra.mxu0 0.0
    %v1410 = vand.u32 %v1284, 4294901760
    %v1411 = vsub.f32 %v1284, %v1410
    %v1412 = vand.u32 %v1411, 4294901760
    %1413 = vmatpush.msra.mxu0 %v1412
    %v1414 = vand.u32 %v1282, 4294901760
    %v1415 = vsub.f32 %v1282, %v1414
    %v1416 = vand.u32 %v1415, 4294901760
    %1417 = vmatpush.msra.mxu0 %v1416
    %v1418 = vand.u32 %v492, 4294901760
    %1419 = vmatmul.f32.gmra.mxu0 %v1418
    %v1420 = vpop.f32.mrf.mxu0
    %v1421 = vadd.f32 %v1394, %v1420
    %1422 = vdwg.mxu0
    %1423 = vmatpush.msra.mxu0 0.0
    %1424 = vmatpush.msra.mxu0 0.0
    %1425 = vmatpush.msra.mxu0 0.0
    %1426 = vmatpush.msra.mxu0 0.0
    %1427 = vmatpush.msra.mxu0 0.0
    %1428 = vmatpush.msra.mxu0 0.0
    %1429 = vmatpush.msra.mxu0 0.0
    %1430 = vmatpush.msra.mxu0 0.0
    %1431 = vmatpush.msra.mxu0 0.0
    %1432 = vmatpush.msra.mxu0 0.0
    %1433 = vmatpush.msra.mxu0 0.0
    %1434 = vmatpush.msra.mxu0 0.0
    %1435 = vmatpush.msra.mxu0 0.0
    %1436 = vmatpush.msra.mxu0 0.0
    %v1437 = vand.u32 %v1284, 4294901760
    %1438 = vmatpush.msra.mxu0 %v1437
    %v1439 = vand.u32 %v1282, 4294901760
    %1440 = vmatpush.msra.mxu0 %v1439
    %v1441 = vand.u32 %v492, 4294901760
    %1442 = vmatmul.f32.gmra.mxu0 %v1441
    %v1443 = vpop.f32.mrf.mxu0
    %v1444 = vadd.f32 %v1421, %v1443
    %1445 = vdwg.mxu0
    %1446 = vmatpush.msra.mxu0 0.0
    %1447 = vmatpush.msra.mxu0 0.0
    %1448 = vmatpush.msra.mxu0 0.0
    %1449 = vmatpush.msra.mxu0 0.0
    %1450 = vmatpush.msra.mxu0 0.0
    %1451 = vmatpush.msra.mxu0 0.0
    %1452 = vmatpush.msra.mxu0 0.0
    %1453 = vmatpush.msra.mxu0 0.0
    %1454 = vmatpush.msra.mxu0 0.0
    %1455 = vmatpush.msra.mxu0 0.0
    %1456 = vmatpush.msra.mxu0 0.0
    %1457 = vmatpush.msra.mxu0 0.0
    %1458 = vmatpush.msra.mxu0 0.0
    %1459 = vmatpush.msra.mxu0 0.0
    %v1460 = vand.u32 %v478, 4294901760
    %1461 = vmatpush.msra.mxu0 %v1460
    %v1462 = vand.u32 %v477, 4294901760
    %1463 = vmatpush.msra.mxu0 %v1462
    %v1464 = vand.u32 %v654, 4294901760
    %v1465 = vsub.f32 %v654, %v1464
    %v1466 = vand.u32 %v1465, 4294901760
    %v1467 = vsub.f32 %v1465, %v1466
    %v1468 = vand.u32 %v1467, 4294901760
    %1469 = vmatmul.f32.gmra.mxu0 %v1468
    %v1470 = vpop.f32.mrf.mxu0
    %v1471 = vadd.f32 %v1444, %v1470
    %1472 = vdwg.mxu0
    %1473 = vmatpush.msra.mxu0 0.0
    %1474 = vmatpush.msra.mxu0 0.0
    %1475 = vmatpush.msra.mxu0 0.0
    %1476 = vmatpush.msra.mxu0 0.0
    %1477 = vmatpush.msra.mxu0 0.0
    %1478 = vmatpush.msra.mxu0 0.0
    %1479 = vmatpush.msra.mxu0 0.0
    %1480 = vmatpush.msra.mxu0 0.0
    %1481 = vmatpush.msra.mxu0 0.0
    %1482 = vmatpush.msra.mxu0 0.0
    %1483 = vmatpush.msra.mxu0 0.0
    %1484 = vmatpush.msra.mxu0 0.0
    %1485 = vmatpush.msra.mxu0 0.0
    %1486 = vmatpush.msra.mxu0 0.0
    %v1487 = vand.u32 %v478, 4294901760
    %v1488 = vsub.f32 %v478, %v1487
    %v1489 = vand.u32 %v1488, 4294901760
    %v1490 = vsub.f32 %v1488, %v1489
    %v1491 = vand.u32 %v1490, 4294901760
    %1492 = vmatpush.msra.mxu0 %v1491
    %v1493 = vand.u32 %v477, 4294901760
    %v1494 = vsub.f32 %v477, %v1493
    %v1495 = vand.u32 %v1494, 4294901760
    %v1496 = vsub.f32 %v1494, %v1495
    %v1497 = vand.u32 %v1496, 4294901760
    %1498 = vmatpush.msra.mxu0 %v1497
    %v1499 = vand.u32 %v654, 4294901760
    %1500 = vmatmul.f32.gmra.mxu0 %v1499
    %v1501 = vpop.f32.mrf.mxu0
    %v1502 = vadd.f32 %v1471, %v1501
    %1503 = vdwg.mxu0
    %1504 = vmatpush.msra.mxu0 0.0
    %1505 = vmatpush.msra.mxu0 0.0
    %1506 = vmatpush.msra.mxu0 0.0
    %1507 = vmatpush.msra.mxu0 0.0
    %1508 = vmatpush.msra.mxu0 0.0
    %1509 = vmatpush.msra.mxu0 0.0
    %1510 = vmatpush.msra.mxu0 0.0
    %1511 = vmatpush.msra.mxu0 0.0
    %1512 = vmatpush.msra.mxu0 0.0
    %1513 = vmatpush.msra.mxu0 0.0
    %1514 = vmatpush.msra.mxu0 0.0
    %1515 = vmatpush.msra.mxu0 0.0
    %1516 = vmatpush.msra.mxu0 0.0
    %1517 = vmatpush.msra.mxu0 0.0
    %v1518 = vand.u32 %v478, 4294901760
    %v1519 = vsub.f32 %v478, %v1518
    %1520 = vmatpush.msra.mxu0 %v1519
    %v1521 = vand.u32 %v477, 4294901760
    %v1522 = vsub.f32 %v477, %v1521
    %1523 = vmatpush.msra.mxu0 %v1522
    %v1524 = vand.u32 %v654, 4294901760
    %v1525 = vsub.f32 %v654, %v1524
    %1526 = vmatmul.f32.gmra.mxu0 %v1525
    %v1527 = vpop.f32.mrf.mxu0
    %v1528 = vadd.f32 %v1502, %v1527
    %1529 = vdwg.mxu0
    %1530 = vmatpush.msra.mxu0 0.0
    %1531 = vmatpush.msra.mxu0 0.0
    %1532 = vmatpush.msra.mxu0 0.0
    %1533 = vmatpush.msra.mxu0 0.0
    %1534 = vmatpush.msra.mxu0 0.0
    %1535 = vmatpush.msra.mxu0 0.0
    %1536 = vmatpush.msra.mxu0 0.0
    %1537 = vmatpush.msra.mxu0 0.0
    %1538 = vmatpush.msra.mxu0 0.0
    %1539 = vmatpush.msra.mxu0 0.0
    %1540 = vmatpush.msra.mxu0 0.0
    %1541 = vmatpush.msra.mxu0 0.0
    %1542 = vmatpush.msra.mxu0 0.0
    %1543 = vmatpush.msra.mxu0 0.0
    %v1544 = vand.u32 %v478, 4294901760
    %1545 = vmatpush.msra.mxu0 %v1544
    %v1546 = vand.u32 %v477, 4294901760
    %1547 = vmatpush.msra.mxu0 %v1546
    %v1548 = vand.u32 %v654, 4294901760
    %v1549 = vsub.f32 %v654, %v1548
    %v1550 = vand.u32 %v1549, 4294901760
    %1551 = vmatmul.f32.gmra.mxu0 %v1550
    %v1552 = vpop.f32.mrf.mxu0
    %v1553 = vadd.f32 %v1528, %v1552
    %1554 = vdwg.mxu0
    %1555 = vmatpush.msra.mxu0 0.0
    %1556 = vmatpush.msra.mxu0 0.0
    %1557 = vmatpush.msra.mxu0 0.0
    %1558 = vmatpush.msra.mxu0 0.0
    %1559 = vmatpush.msra.mxu0 0.0
    %1560 = vmatpush.msra.mxu0 0.0
    %1561 = vmatpush.msra.mxu0 0.0
    %1562 = vmatpush.msra.mxu0 0.0
    %1563 = vmatpush.msra.mxu0 0.0
    %1564 = vmatpush.msra.mxu0 0.0
    %1565 = vmatpush.msra.mxu0 0.0
    %1566 = vmatpush.msra.mxu0 0.0
    %1567 = vmatpush.msra.mxu0 0.0
    %1568 = vmatpush.msra.mxu0 0.0
    %v1569 = vand.u32 %v478, 4294901760
    %v1570 = vsub.f32 %v478, %v1569
    %v1571 = vand.u32 %v1570, 4294901760
    %1572 = vmatpush.msra.mxu0 %v1571
    %v1573 = vand.u32 %v477, 4294901760
    %v1574 = vsub.f32 %v477, %v1573
    %v1575 = vand.u32 %v1574, 4294901760
    %1576 = vmatpush.msra.mxu0 %v1575
    %v1577 = vand.u32 %v654, 4294901760
    %1578 = vmatmul.f32.gmra.mxu0 %v1577
    %v1579 = vpop.f32.mrf.mxu0
    %v1580 = vadd.f32 %v1553, %v1579
    %1581 = vdwg.mxu0
    %1582 = vmatpush.msra.mxu0 0.0
    %1583 = vmatpush.msra.mxu0 0.0
    %1584 = vmatpush.msra.mxu0 0.0
    %1585 = vmatpush.msra.mxu0 0.0
    %1586 = vmatpush.msra.mxu0 0.0
    %1587 = vmatpush.msra.mxu0 0.0
    %1588 = vmatpush.msra.mxu0 0.0
    %1589 = vmatpush.msra.mxu0 0.0
    %1590 = vmatpush.msra.mxu0 0.0
    %1591 = vmatpush.msra.mxu0 0.0
    %1592 = vmatpush.msra.mxu0 0.0
    %1593 = vmatpush.msra.mxu0 0.0
    %1594 = vmatpush.msra.mxu0 0.0
    %1595 = vmatpush.msra.mxu0 0.0
    %v1596 = vand.u32 %v478, 4294901760
    %1597 = vmatpush.msra.mxu0 %v1596
    %v1598 = vand.u32 %v477, 4294901760
    %1599 = vmatpush.msra.mxu0 %v1598
    %v1600 = vand.u32 %v654, 4294901760
    %1601 = vmatmul.f32.gmra.mxu0 %v1600
    %v1602 = vpop.f32.mrf.mxu0
    %v1603 = vadd.f32 %v1580, %v1602
    %1604 = vdwg.mxu0
    %v1605 = vmax.f32 %v1603, 0.0
    %v1607 = vsel %vm825, %v1605, 0
    %1609 = vmatpush.msra.mxu0 0.0
    %1610 = vmatpush.msra.mxu0 0.0
    %1611 = vmatpush.msra.mxu0 0.0
    %1612 = vmatpush.msra.mxu0 0.0
    %1613 = vmatpush.msra.mxu0 0.0
    %1614 = vmatpush.msra.mxu0 0.0
    %1615 = vmatpush.msra.mxu0 0.0
    %1616 = vmatpush.msra.mxu0 0.0
    %1617 = vmatpush.msra.mxu0 0.0
    %1618 = vmatpush.msra.mxu0 0.0
    %1619 = vmatpush.msra.mxu0 0.0
    %1620 = vmatpush.msra.mxu0 0.0
    %1621 = vmatpush.msra.mxu0 0.0
    %1622 = vmatpush.msra.mxu0 0.0
    %1623 = vmatpush.msra.mxu0 0.0
    %v1624 = vand.u32 %v1607, 4294901760
    %1625 = vmatpush.msra.mxu0 %v1624
    %v1626 = vand.u32 %v820, 4294901760
    %v1627 = vsub.f32 %v820, %v1626
    %v1628 = vand.u32 %v1627, 4294901760
    %v1629 = vsub.f32 %v1627, %v1628
    %v1630 = vand.u32 %v1629, 4294901760
    %1631 = vmatmul.f32.gmra.mxu0 %v1630
    %v1632 = vpop.f32.mrf.mxu0
    %v1633 = vadd.f32 0.0, %v1632
    %v1634 = vand.u32 %v823, 4294901760
    %v1635 = vsub.f32 %v823, %v1634
    %v1636 = vand.u32 %v1635, 4294901760
    %v1637 = vsub.f32 %v1635, %v1636
    %v1638 = vand.u32 %v1637, 4294901760
    %1639 = vmatmul.f32.gmra.mxu0 %v1638
    %v1640 = vpop.f32.mrf.mxu0
    %v1641 = vadd.f32 0.0, %v1640
    %1642 = vdwg.mxu0
    %1643 = vmatpush.msra.mxu0 0.0
    %1644 = vmatpush.msra.mxu0 0.0
    %1645 = vmatpush.msra.mxu0 0.0
    %1646 = vmatpush.msra.mxu0 0.0
    %1647 = vmatpush.msra.mxu0 0.0
    %1648 = vmatpush.msra.mxu0 0.0
    %1649 = vmatpush.msra.mxu0 0.0
    %1650 = vmatpush.msra.mxu0 0.0
    %1651 = vmatpush.msra.mxu0 0.0
    %1652 = vmatpush.msra.mxu0 0.0
    %1653 = vmatpush.msra.mxu0 0.0
    %1654 = vmatpush.msra.mxu0 0.0
    %1655 = vmatpush.msra.mxu0 0.0
    %1656 = vmatpush.msra.mxu0 0.0
    %1657 = vmatpush.msra.mxu0 0.0
    %v1658 = vand.u32 %v1607, 4294901760
    %v1659 = vsub.f32 %v1607, %v1658
    %v1660 = vand.u32 %v1659, 4294901760
    %v1661 = vsub.f32 %v1659, %v1660
    %v1662 = vand.u32 %v1661, 4294901760
    %1663 = vmatpush.msra.mxu0 %v1662
    %v1664 = vand.u32 %v820, 4294901760
    %1665 = vmatmul.f32.gmra.mxu0 %v1664
    %v1666 = vpop.f32.mrf.mxu0
    %v1667 = vadd.f32 %v1633, %v1666
    %v1668 = vand.u32 %v823, 4294901760
    %1669 = vmatmul.f32.gmra.mxu0 %v1668
    %v1670 = vpop.f32.mrf.mxu0
    %v1671 = vadd.f32 %v1641, %v1670
    %1672 = vdwg.mxu0
    %1673 = vmatpush.msra.mxu0 0.0
    %1674 = vmatpush.msra.mxu0 0.0
    %1675 = vmatpush.msra.mxu0 0.0
    %1676 = vmatpush.msra.mxu0 0.0
    %1677 = vmatpush.msra.mxu0 0.0
    %1678 = vmatpush.msra.mxu0 0.0
    %1679 = vmatpush.msra.mxu0 0.0
    %1680 = vmatpush.msra.mxu0 0.0
    %1681 = vmatpush.msra.mxu0 0.0
    %1682 = vmatpush.msra.mxu0 0.0
    %1683 = vmatpush.msra.mxu0 0.0
    %1684 = vmatpush.msra.mxu0 0.0
    %1685 = vmatpush.msra.mxu0 0.0
    %1686 = vmatpush.msra.mxu0 0.0
    %1687 = vmatpush.msra.mxu0 0.0
    %v1688 = vand.u32 %v1607, 4294901760
    %v1689 = vsub.f32 %v1607, %v1688
    %1690 = vmatpush.msra.mxu0 %v1689
    %v1691 = vand.u32 %v820, 4294901760
    %v1692 = vsub.f32 %v820, %v1691
    %1693 = vmatmul.f32.gmra.mxu0 %v1692
    %v1694 = vpop.f32.mrf.mxu0
    %v1695 = vadd.f32 %v1667, %v1694
    %v1696 = vand.u32 %v823, 4294901760
    %v1697 = vsub.f32 %v823, %v1696
    %1698 = vmatmul.f32.gmra.mxu0 %v1697
    %v1699 = vpop.f32.mrf.mxu0
    %v1700 = vadd.f32 %v1671, %v1699
    %1701 = vdwg.mxu0
    %1702 = vmatpush.msra.mxu0 0.0
    %1703 = vmatpush.msra.mxu0 0.0
    %1704 = vmatpush.msra.mxu0 0.0
    %1705 = vmatpush.msra.mxu0 0.0
    %1706 = vmatpush.msra.mxu0 0.0
    %1707 = vmatpush.msra.mxu0 0.0
    %1708 = vmatpush.msra.mxu0 0.0
    %1709 = vmatpush.msra.mxu0 0.0
    %1710 = vmatpush.msra.mxu0 0.0
    %1711 = vmatpush.msra.mxu0 0.0
    %1712 = vmatpush.msra.mxu0 0.0
    %1713 = vmatpush.msra.mxu0 0.0
    %1714 = vmatpush.msra.mxu0 0.0
    %1715 = vmatpush.msra.mxu0 0.0
    %1716 = vmatpush.msra.mxu0 0.0
    %v1717 = vand.u32 %v1607, 4294901760
    %1718 = vmatpush.msra.mxu0 %v1717
    %v1719 = vand.u32 %v820, 4294901760
    %v1720 = vsub.f32 %v820, %v1719
    %v1721 = vand.u32 %v1720, 4294901760
    %1722 = vmatmul.f32.gmra.mxu0 %v1721
    %v1723 = vpop.f32.mrf.mxu0
    %v1724 = vadd.f32 %v1695, %v1723
    %v1725 = vand.u32 %v823, 4294901760
    %v1726 = vsub.f32 %v823, %v1725
    %v1727 = vand.u32 %v1726, 4294901760
    %1728 = vmatmul.f32.gmra.mxu0 %v1727
    %v1729 = vpop.f32.mrf.mxu0
    %v1730 = vadd.f32 %v1700, %v1729
    %1731 = vdwg.mxu0
    %1732 = vmatpush.msra.mxu0 0.0
    %1733 = vmatpush.msra.mxu0 0.0
    %1734 = vmatpush.msra.mxu0 0.0
    %1735 = vmatpush.msra.mxu0 0.0
    %1736 = vmatpush.msra.mxu0 0.0
    %1737 = vmatpush.msra.mxu0 0.0
    %1738 = vmatpush.msra.mxu0 0.0
    %1739 = vmatpush.msra.mxu0 0.0
    %1740 = vmatpush.msra.mxu0 0.0
    %1741 = vmatpush.msra.mxu0 0.0
    %1742 = vmatpush.msra.mxu0 0.0
    %1743 = vmatpush.msra.mxu0 0.0
    %1744 = vmatpush.msra.mxu0 0.0
    %1745 = vmatpush.msra.mxu0 0.0
    %1746 = vmatpush.msra.mxu0 0.0
    %v1747 = vand.u32 %v1607, 4294901760
    %v1748 = vsub.f32 %v1607, %v1747
    %v1749 = vand.u32 %v1748, 4294901760
    %1750 = vmatpush.msra.mxu0 %v1749
    %v1751 = vand.u32 %v820, 4294901760
    %1752 = vmatmul.f32.gmra.mxu0 %v1751
    %v1753 = vpop.f32.mrf.mxu0
    %v1754 = vadd.f32 %v1724, %v1753
    %v1755 = vand.u32 %v823, 4294901760
    %1756 = vmatmul.f32.gmra.mxu0 %v1755
    %v1757 = vpop.f32.mrf.mxu0
    %v1758 = vadd.f32 %v1730, %v1757
    %1759 = vdwg.mxu0
    %1760 = vmatpush.msra.mxu0 0.0
    %1761 = vmatpush.msra.mxu0 0.0
    %1762 = vmatpush.msra.mxu0 0.0
    %1763 = vmatpush.msra.mxu0 0.0
    %1764 = vmatpush.msra.mxu0 0.0
    %1765 = vmatpush.msra.mxu0 0.0
    %1766 = vmatpush.msra.mxu0 0.0
    %1767 = vmatpush.msra.mxu0 0.0
    %1768 = vmatpush.msra.mxu0 0.0
    %1769 = vmatpush.msra.mxu0 0.0
    %1770 = vmatpush.msra.mxu0 0.0
    %1771 = vmatpush.msra.mxu0 0.0
    %1772 = vmatpush.msra.mxu0 0.0
    %1773 = vmatpush.msra.mxu0 0.0
    %1774 = vmatpush.msra.mxu0 0.0
    %v1775 = vand.u32 %v1607, 4294901760
    %1776 = vmatpush.msra.mxu0 %v1775
    %v1777 = vand.u32 %v820, 4294901760
    %1778 = vmatmul.f32.gmra.mxu0 %v1777
    %v1779 = vpop.f32.mrf.mxu0
    %v1780 = vadd.f32 %v1754, %v1779
    %v1781 = vand.u32 %v823, 4294901760
    %1782 = vmatmul.f32.gmra.mxu0 %v1781
    %v1783 = vpop.f32.mrf.mxu0
    %v1784 = vadd.f32 %v1758, %v1783
    %1785 = vdwg.mxu0
    %v1786 = vxor.u32 %v1780, 2147483648
    %v1787 = vxor.u32 %v1784, 2147483648
    %v1788 = vmul.f32 %v1786, 1.442695
    %v1789 = vpow.pop %v1788
    %v1790 = vmul.f32 %v1787, 1.442695
    %v1791 = vpow.pop %v1790
    %v1792 = vadd.f32 %v1789, 1.0
    %v1793 = vadd.f32 %v1791, 1.0
    %v1794 = vrcp.pop %v1792
    %v1795 = vmul.f32 %v1792, %v1794
    %v1796 = vsub.f32 1.0, %v1795
    %v1797 = vmul.f32 %v1794, %v1796
    %v1798 = vadd.f32 %v1794, %v1797
    %vm1799 = vweird.f32 %v1792
    %vm1800 = vweird.f32 %v1794
    %vm1801 = vmor %vm1799, %vm1800
    %v1802 = vsel %vm1801, %v1794, %v1798
    %v1803 = vand.u32 2147483647, %v1792
    %vm1804 = vcmp.eq.f32.partialorder %v1803, 8.507059e+37
    %v1805 = vand.u32 %v1792, 2147483648
    %v1806 = vor.u32 1.1754944e-38, %v1805
    %v1807 = vsel %vm1804, %v1806, %v1802
    %v1808 = vmul.f32 1.0, %v1807
    %v1809 = vrcp.pop %v1793
    %v1810 = vmul.f32 %v1793, %v1809
    %v1811 = vsub.f32 1.0, %v1810
    %v1812 = vmul.f32 %v1809, %v1811
    %v1813 = vadd.f32 %v1809, %v1812
    %vm1814 = vweird.f32 %v1793
    %vm1815 = vweird.f32 %v1809
    %vm1816 = vmor %vm1814, %vm1815
    %v1817 = vsel %vm1816, %v1809, %v1813
    %v1818 = vand.u32 2147483647, %v1793
    %vm1819 = vcmp.eq.f32.partialorder %v1818, 8.507059e+37
    %v1820 = vand.u32 %v1793, 2147483648
    %v1821 = vor.u32 1.1754944e-38, %v1820
    %v1822 = vsel %vm1819, %v1821, %v1817
    %v1823 = vmul.f32 1.0, %v1822
    %1824 = vmatpush.msra.mxu0 0.0
    %1825 = vmatpush.msra.mxu0 0.0
    %1826 = vmatpush.msra.mxu0 0.0
    %1827 = vmatpush.msra.mxu0 0.0
    %1828 = vmatpush.msra.mxu0 0.0
    %1829 = vmatpush.msra.mxu0 0.0
    %1830 = vmatpush.msra.mxu0 0.0
    %1831 = vmatpush.msra.mxu0 0.0
    %1832 = vmatpush.msra.mxu0 0.0
    %1833 = vmatpush.msra.mxu0 0.0
    %1834 = vmatpush.msra.mxu0 0.0
    %1835 = vmatpush.msra.mxu0 0.0
    %1836 = vmatpush.msra.mxu0 0.0
    %1837 = vmatpush.msra.mxu0 0.0
    %1838 = vmatpush.msra.mxu0 0.0
    %v1839 = vand.u32 %v1607, 4294901760
    %1840 = vmatpush.msra.mxu0 %v1839
    %v1841 = vand.u32 %v1048, 4294901760
    %v1842 = vsub.f32 %v1048, %v1841
    %v1843 = vand.u32 %v1842, 4294901760
    %v1844 = vsub.f32 %v1842, %v1843
    %v1845 = vand.u32 %v1844, 4294901760
    %1846 = vmatmul.f32.gmra.mxu0 %v1845
    %v1847 = vpop.f32.mrf.mxu0
    %v1848 = vadd.f32 0.0, %v1847
    %v1849 = vand.u32 %v1051, 4294901760
    %v1850 = vsub.f32 %v1051, %v1849
    %v1851 = vand.u32 %v1850, 4294901760
    %v1852 = vsub.f32 %v1850, %v1851
    %v1853 = vand.u32 %v1852, 4294901760
    %1854 = vmatmul.f32.gmra.mxu0 %v1853
    %v1855 = vpop.f32.mrf.mxu0
    %v1856 = vadd.f32 0.0, %v1855
    %1857 = vdwg.mxu0
    %1858 = vmatpush.msra.mxu0 0.0
    %1859 = vmatpush.msra.mxu0 0.0
    %1860 = vmatpush.msra.mxu0 0.0
    %1861 = vmatpush.msra.mxu0 0.0
    %1862 = vmatpush.msra.mxu0 0.0
    %1863 = vmatpush.msra.mxu0 0.0
    %1864 = vmatpush.msra.mxu0 0.0
    %1865 = vmatpush.msra.mxu0 0.0
    %1866 = vmatpush.msra.mxu0 0.0
    %1867 = vmatpush.msra.mxu0 0.0
    %1868 = vmatpush.msra.mxu0 0.0
    %1869 = vmatpush.msra.mxu0 0.0
    %1870 = vmatpush.msra.mxu0 0.0
    %1871 = vmatpush.msra.mxu0 0.0
    %1872 = vmatpush.msra.mxu0 0.0
    %v1873 = vand.u32 %v1607, 4294901760
    %v1874 = vsub.f32 %v1607, %v1873
    %v1875 = vand.u32 %v1874, 4294901760
    %v1876 = vsub.f32 %v1874, %v1875
    %v1877 = vand.u32 %v1876, 4294901760
    %1878 = vmatpush.msra.mxu0 %v1877
    %v1879 = vand.u32 %v1048, 4294901760
    %1880 = vmatmul.f32.gmra.mxu0 %v1879
    %v1881 = vpop.f32.mrf.mxu0
    %v1882 = vadd.f32 %v1848, %v1881
    %v1883 = vand.u32 %v1051, 4294901760
    %1884 = vmatmul.f32.gmra.mxu0 %v1883
    %v1885 = vpop.f32.mrf.mxu0
    %v1886 = vadd.f32 %v1856, %v1885
    %1887 = vdwg.mxu0
    %1888 = vmatpush.msra.mxu0 0.0
    %1889 = vmatpush.msra.mxu0 0.0
    %1890 = vmatpush.msra.mxu0 0.0
    %1891 = vmatpush.msra.mxu0 0.0
    %1892 = vmatpush.msra.mxu0 0.0
    %1893 = vmatpush.msra.mxu0 0.0
    %1894 = vmatpush.msra.mxu0 0.0
    %1895 = vmatpush.msra.mxu0 0.0
    %1896 = vmatpush.msra.mxu0 0.0
    %1897 = vmatpush.msra.mxu0 0.0
    %1898 = vmatpush.msra.mxu0 0.0
    %1899 = vmatpush.msra.mxu0 0.0
    %1900 = vmatpush.msra.mxu0 0.0
    %1901 = vmatpush.msra.mxu0 0.0
    %1902 = vmatpush.msra.mxu0 0.0
    %v1903 = vand.u32 %v1607, 4294901760
    %v1904 = vsub.f32 %v1607, %v1903
    %1905 = vmatpush.msra.mxu0 %v1904
    %v1906 = vand.u32 %v1048, 4294901760
    %v1907 = vsub.f32 %v1048, %v1906
    %1908 = vmatmul.f32.gmra.mxu0 %v1907
    %v1909 = vpop.f32.mrf.mxu0
    %v1910 = vadd.f32 %v1882, %v1909
    %v1911 = vand.u32 %v1051, 4294901760
    %v1912 = vsub.f32 %v1051, %v1911
    %1913 = vmatmul.f32.gmra.mxu0 %v1912
    %v1914 = vpop.f32.mrf.mxu0
    %v1915 = vadd.f32 %v1886, %v1914
    %1916 = vdwg.mxu0
    %1917 = vmatpush.msra.mxu0 0.0
    %1918 = vmatpush.msra.mxu0 0.0
    %1919 = vmatpush.msra.mxu0 0.0
    %1920 = vmatpush.msra.mxu0 0.0
    %1921 = vmatpush.msra.mxu0 0.0
    %1922 = vmatpush.msra.mxu0 0.0
    %1923 = vmatpush.msra.mxu0 0.0
    %1924 = vmatpush.msra.mxu0 0.0
    %1925 = vmatpush.msra.mxu0 0.0
    %1926 = vmatpush.msra.mxu0 0.0
    %1927 = vmatpush.msra.mxu0 0.0
    %1928 = vmatpush.msra.mxu0 0.0
    %1929 = vmatpush.msra.mxu0 0.0
    %1930 = vmatpush.msra.mxu0 0.0
    %1931 = vmatpush.msra.mxu0 0.0
    %v1932 = vand.u32 %v1607, 4294901760
    %1933 = vmatpush.msra.mxu0 %v1932
    %v1934 = vand.u32 %v1048, 4294901760
    %v1935 = vsub.f32 %v1048, %v1934
    %v1936 = vand.u32 %v1935, 4294901760
    %1937 = vmatmul.f32.gmra.mxu0 %v1936
    %v1938 = vpop.f32.mrf.mxu0
    %v1939 = vadd.f32 %v1910, %v1938
    %v1940 = vand.u32 %v1051, 4294901760
    %v1941 = vsub.f32 %v1051, %v1940
    %v1942 = vand.u32 %v1941, 4294901760
    %1943 = vmatmul.f32.gmra.mxu0 %v1942
    %v1944 = vpop.f32.mrf.mxu0
    %v1945 = vadd.f32 %v1915, %v1944
    %1946 = vdwg.mxu0
    %1947 = vmatpush.msra.mxu0 0.0
    %1948 = vmatpush.msra.mxu0 0.0
    %1949 = vmatpush.msra.mxu0 0.0
    %1950 = vmatpush.msra.mxu0 0.0
    %1951 = vmatpush.msra.mxu0 0.0
    %1952 = vmatpush.msra.mxu0 0.0
    %1953 = vmatpush.msra.mxu0 0.0
    %1954 = vmatpush.msra.mxu0 0.0
    %1955 = vmatpush.msra.mxu0 0.0
    %1956 = vmatpush.msra.mxu0 0.0
    %1957 = vmatpush.msra.mxu0 0.0
    %1958 = vmatpush.msra.mxu0 0.0
    %1959 = vmatpush.msra.mxu0 0.0
    %1960 = vmatpush.msra.mxu0 0.0
    %1961 = vmatpush.msra.mxu0 0.0
    %v1962 = vand.u32 %v1607, 4294901760
    %v1963 = vsub.f32 %v1607, %v1962
    %v1964 = vand.u32 %v1963, 4294901760
    %1965 = vmatpush.msra.mxu0 %v1964
    %v1966 = vand.u32 %v1048, 4294901760
    %1967 = vmatmul.f32.gmra.mxu0 %v1966
    %v1968 = vpop.f32.mrf.mxu0
    %v1969 = vadd.f32 %v1939, %v1968
    %v1970 = vand.u32 %v1051, 4294901760
    %1971 = vmatmul.f32.gmra.mxu0 %v1970
    %v1972 = vpop.f32.mrf.mxu0
    %v1973 = vadd.f32 %v1945, %v1972
    %1974 = vdwg.mxu0
    %1975 = vmatpush.msra.mxu0 0.0
    %1976 = vmatpush.msra.mxu0 0.0
    %1977 = vmatpush.msra.mxu0 0.0
    %1978 = vmatpush.msra.mxu0 0.0
    %1979 = vmatpush.msra.mxu0 0.0
    %1980 = vmatpush.msra.mxu0 0.0
    %1981 = vmatpush.msra.mxu0 0.0
    %1982 = vmatpush.msra.mxu0 0.0
    %1983 = vmatpush.msra.mxu0 0.0
    %1984 = vmatpush.msra.mxu0 0.0
    %1985 = vmatpush.msra.mxu0 0.0
    %1986 = vmatpush.msra.mxu0 0.0
    %1987 = vmatpush.msra.mxu0 0.0
    %1988 = vmatpush.msra.mxu0 0.0
    %1989 = vmatpush.msra.mxu0 0.0
    %v1990 = vand.u32 %v1607, 4294901760
    %1991 = vmatpush.msra.mxu0 %v1990
    %v1992 = vand.u32 %v1048, 4294901760
    %1993 = vmatmul.f32.gmra.mxu0 %v1992
    %v1994 = vpop.f32.mrf.mxu0
    %v1995 = vadd.f32 %v1969, %v1994
    %v1996 = vand.u32 %v1051, 4294901760
    %1997 = vmatmul.f32.gmra.mxu0 %v1996
    %v1998 = vpop.f32.mrf.mxu0
    %v1999 = vadd.f32 %v1973, %v1998
    %2000 = vdwg.mxu0
    %v2001 = vxor.u32 %v1995, 2147483648
    %v2002 = vxor.u32 %v1999, 2147483648
    %v2003 = vmul.f32 %v2001, 1.442695
    %v2004 = vpow.pop %v2003
    %v2005 = vmul.f32 %v2002, 1.442695
    %v2006 = vpow.pop %v2005
    %v2007 = vadd.f32 %v2004, 1.0
    %v2008 = vadd.f32 %v2006, 1.0
    %v2009 = vrcp.pop %v2007
    %v2010 = vmul.f32 %v2007, %v2009
    %v2011 = vsub.f32 1.0, %v2010
    %v2012 = vmul.f32 %v2009, %v2011
    %v2013 = vadd.f32 %v2009, %v2012
    %vm2014 = vweird.f32 %v2007
    %vm2015 = vweird.f32 %v2009
    %vm2016 = vmor %vm2014, %vm2015
    %v2017 = vsel %vm2016, %v2009, %v2013
    %v2018 = vand.u32 2147483647, %v2007
    %vm2019 = vcmp.eq.f32.partialorder %v2018, 8.507059e+37
    %v2020 = vand.u32 %v2007, 2147483648
    %v2021 = vor.u32 1.1754944e-38, %v2020
    %v2022 = vsel %vm2019, %v2021, %v2017
    %v2023 = vmul.f32 1.0, %v2022
    %v2024 = vrcp.pop %v2008
    %v2025 = vmul.f32 %v2008, %v2024
    %v2026 = vsub.f32 1.0, %v2025
    %v2027 = vmul.f32 %v2024, %v2026
    %v2028 = vadd.f32 %v2024, %v2027
    %vm2029 = vweird.f32 %v2008
    %vm2030 = vweird.f32 %v2024
    %vm2031 = vmor %vm2029, %vm2030
    %v2032 = vsel %vm2031, %v2024, %v2028
    %v2033 = vand.u32 2147483647, %v2008
    %vm2034 = vcmp.eq.f32.partialorder %v2033, 8.507059e+37
    %v2035 = vand.u32 %v2008, 2147483648
    %v2036 = vor.u32 1.1754944e-38, %v2035
    %v2037 = vsel %vm2034, %v2036, %v2032
    %v2038 = vmul.f32 1.0, %v2037
    %2041 = vrot.lane.b32.xlu0 %v2023, 1
    %v2042 = vpop.permute.xlu0 %2041
    %2043 = vrot.lane.b32.xlu0 %v2038, 1
    %v2044 = vpop.permute.xlu0 %2043
    %v2047 = vsel %vm1276, %v1808, %v2042
    %v2048 = vsel %vm1276, %v1823, %v2044
    %v2049 = vld [vmem:[%s2] sm:$0x3]
    %v2051 = vsel %vm818, %v1277, 0
    %v2054 = vsel %vm818, %v1278, 0
    %v2057 = vsel %vm818, %v2047, 0
    %v2060 = vsel %vm818, %v2048, 0
    %v2063 = vsel %vm825, %v2049, 0
    %2065 = vmatpush.msra.mxu0 0.0
    %2066 = vmatpush.msra.mxu0 0.0
    %2067 = vmatpush.msra.mxu0 0.0
    %2068 = vmatpush.msra.mxu0 0.0
    %2069 = vmatpush.msra.mxu0 0.0
    %2070 = vmatpush.msra.mxu0 0.0
    %2071 = vmatpush.msra.mxu0 0.0
    %2072 = vmatpush.msra.mxu0 0.0
    %2073 = vmatpush.msra.mxu0 0.0
    %2074 = vmatpush.msra.mxu0 0.0
    %2075 = vmatpush.msra.mxu0 0.0
    %2076 = vmatpush.msra.mxu0 0.0
    %2077 = vmatpush.msra.mxu0 0.0
    %2078 = vmatpush.msra.mxu0 0.0
    %2079 = vmatpush.msra.mxu0 0.0
    %v2080 = vand.u32 %v2063, 4294901760
    %2081 = vmatpush.msra.mxu0 %v2080
    %v2082 = vand.u32 %v2051, 4294901760
    %v2083 = vsub.f32 %v2051, %v2082
    %v2084 = vand.u32 %v2083, 4294901760
    %v2085 = vsub.f32 %v2083, %v2084
    %v2086 = vand.u32 %v2085, 4294901760
    %2087 = vmatmul.f32.gmra.mxu0 %v2086
    %v2088 = vpop.f32.mrf.mxu0
    %v2089 = vadd.f32 0.0, %v2088
    %v2090 = vand.u32 %v2054, 4294901760
    %v2091 = vsub.f32 %v2054, %v2090
    %v2092 = vand.u32 %v2091, 4294901760
    %v2093 = vsub.f32 %v2091, %v2092
    %v2094 = vand.u32 %v2093, 4294901760
    %2095 = vmatmul.f32.gmra.mxu0 %v2094
    %v2096 = vpop.f32.mrf.mxu0
    %v2097 = vadd.f32 0.0, %v2096
    %v2098 = vand.u32 %v2057, 4294901760
    %v2099 = vsub.f32 %v2057, %v2098
    %v2100 = vand.u32 %v2099, 4294901760
    %v2101 = vsub.f32 %v2099, %v2100
    %v2102 = vand.u32 %v2101, 4294901760
    %2103 = vmatmul.f32.gmra.mxu0 %v2102
    %v2104 = vpop.f32.mrf.mxu0
    %v2105 = vadd.f32 0.0, %v2104
    %v2106 = vand.u32 %v2060, 4294901760
    %v2107 = vsub.f32 %v2060, %v2106
    %v2108 = vand.u32 %v2107, 4294901760
    %v2109 = vsub.f32 %v2107, %v2108
    %v2110 = vand.u32 %v2109, 4294901760
    %2111 = vmatmul.f32.gmra.mxu0 %v2110
    %v2112 = vpop.f32.mrf.mxu0
    %v2113 = vadd.f32 0.0, %v2112
    %2114 = vdwg.mxu0
    %2115 = vmatpush.msra.mxu0 0.0
    %2116 = vmatpush.msra.mxu0 0.0
    %2117 = vmatpush.msra.mxu0 0.0
    %2118 = vmatpush.msra.mxu0 0.0
    %2119 = vmatpush.msra.mxu0 0.0
    %2120 = vmatpush.msra.mxu0 0.0
    %2121 = vmatpush.msra.mxu0 0.0
    %2122 = vmatpush.msra.mxu0 0.0
    %2123 = vmatpush.msra.mxu0 0.0
    %2124 = vmatpush.msra.mxu0 0.0
    %2125 = vmatpush.msra.mxu0 0.0
    %2126 = vmatpush.msra.mxu0 0.0
    %2127 = vmatpush.msra.mxu0 0.0
    %2128 = vmatpush.msra.mxu0 0.0
    %2129 = vmatpush.msra.mxu0 0.0
    %v2130 = vand.u32 %v2063, 4294901760
    %v2131 = vsub.f32 %v2063, %v2130
    %v2132 = vand.u32 %v2131, 4294901760
    %v2133 = vsub.f32 %v2131, %v2132
    %v2134 = vand.u32 %v2133, 4294901760
    %2135 = vmatpush.msra.mxu0 %v2134
    %v2136 = vand.u32 %v2051, 4294901760
    %2137 = vmatmul.f32.gmra.mxu0 %v2136
    %v2138 = vpop.f32.mrf.mxu0
    %v2139 = vadd.f32 %v2089, %v2138
    %v2140 = vand.u32 %v2054, 4294901760
    %2141 = vmatmul.f32.gmra.mxu0 %v2140
    %v2142 = vpop.f32.mrf.mxu0
    %v2143 = vadd.f32 %v2097, %v2142
    %v2144 = vand.u32 %v2057, 4294901760
    %2145 = vmatmul.f32.gmra.mxu0 %v2144
    %v2146 = vpop.f32.mrf.mxu0
    %v2147 = vadd.f32 %v2105, %v2146
    %v2148 = vand.u32 %v2060, 4294901760
    %2149 = vmatmul.f32.gmra.mxu0 %v2148
    %v2150 = vpop.f32.mrf.mxu0
    %v2151 = vadd.f32 %v2113, %v2150
    %2152 = vdwg.mxu0
    %2153 = vmatpush.msra.mxu0 0.0
    %2154 = vmatpush.msra.mxu0 0.0
    %2155 = vmatpush.msra.mxu0 0.0
    %2156 = vmatpush.msra.mxu0 0.0
    %2157 = vmatpush.msra.mxu0 0.0
    %2158 = vmatpush.msra.mxu0 0.0
    %2159 = vmatpush.msra.mxu0 0.0
    %2160 = vmatpush.msra.mxu0 0.0
    %2161 = vmatpush.msra.mxu0 0.0
    %2162 = vmatpush.msra.mxu0 0.0
    %2163 = vmatpush.msra.mxu0 0.0
    %2164 = vmatpush.msra.mxu0 0.0
    %2165 = vmatpush.msra.mxu0 0.0
    %2166 = vmatpush.msra.mxu0 0.0
    %2167 = vmatpush.msra.mxu0 0.0
    %v2168 = vand.u32 %v2063, 4294901760
    %v2169 = vsub.f32 %v2063, %v2168
    %2170 = vmatpush.msra.mxu0 %v2169
    %v2171 = vand.u32 %v2051, 4294901760
    %v2172 = vsub.f32 %v2051, %v2171
    %2173 = vmatmul.f32.gmra.mxu0 %v2172
    %v2174 = vpop.f32.mrf.mxu0
    %v2175 = vadd.f32 %v2139, %v2174
    %v2176 = vand.u32 %v2054, 4294901760
    %v2177 = vsub.f32 %v2054, %v2176
    %2178 = vmatmul.f32.gmra.mxu0 %v2177
    %v2179 = vpop.f32.mrf.mxu0
    %v2180 = vadd.f32 %v2143, %v2179
    %v2181 = vand.u32 %v2057, 4294901760
    %v2182 = vsub.f32 %v2057, %v2181
    %2183 = vmatmul.f32.gmra.mxu0 %v2182
    %v2184 = vpop.f32.mrf.mxu0
    %v2185 = vadd.f32 %v2147, %v2184
    %v2186 = vand.u32 %v2060, 4294901760
    %v2187 = vsub.f32 %v2060, %v2186
    %2188 = vmatmul.f32.gmra.mxu0 %v2187
    %v2189 = vpop.f32.mrf.mxu0
    %v2190 = vadd.f32 %v2151, %v2189
    %2191 = vdwg.mxu0
    %2192 = vmatpush.msra.mxu0 0.0
    %2193 = vmatpush.msra.mxu0 0.0
    %2194 = vmatpush.msra.mxu0 0.0
    %2195 = vmatpush.msra.mxu0 0.0
    %2196 = vmatpush.msra.mxu0 0.0
    %2197 = vmatpush.msra.mxu0 0.0
    %2198 = vmatpush.msra.mxu0 0.0
    %2199 = vmatpush.msra.mxu0 0.0
    %2200 = vmatpush.msra.mxu0 0.0
    %2201 = vmatpush.msra.mxu0 0.0
    %2202 = vmatpush.msra.mxu0 0.0
    %2203 = vmatpush.msra.mxu0 0.0
    %2204 = vmatpush.msra.mxu0 0.0
    %2205 = vmatpush.msra.mxu0 0.0
    %2206 = vmatpush.msra.mxu0 0.0
    %v2207 = vand.u32 %v2063, 4294901760
    %2208 = vmatpush.msra.mxu0 %v2207
    %v2209 = vand.u32 %v2051, 4294901760
    %v2210 = vsub.f32 %v2051, %v2209
    %v2211 = vand.u32 %v2210, 4294901760
    %2212 = vmatmul.f32.gmra.mxu0 %v2211
    %v2213 = vpop.f32.mrf.mxu0
    %v2214 = vadd.f32 %v2175, %v2213
    %v2215 = vand.u32 %v2054, 4294901760
    %v2216 = vsub.f32 %v2054, %v2215
    %v2217 = vand.u32 %v2216, 4294901760
    %2218 = vmatmul.f32.gmra.mxu0 %v2217
    %v2219 = vpop.f32.mrf.mxu0
    %v2220 = vadd.f32 %v2180, %v2219
    %v2221 = vand.u32 %v2057, 4294901760
    %v2222 = vsub.f32 %v2057, %v2221
    %v2223 = vand.u32 %v2222, 4294901760
    %2224 = vmatmul.f32.gmra.mxu0 %v2223
    %v2225 = vpop.f32.mrf.mxu0
    %v2226 = vadd.f32 %v2185, %v2225
    %v2227 = vand.u32 %v2060, 4294901760
    %v2228 = vsub.f32 %v2060, %v2227
    %v2229 = vand.u32 %v2228, 4294901760
    %2230 = vmatmul.f32.gmra.mxu0 %v2229
    %v2231 = vpop.f32.mrf.mxu0
    %v2232 = vadd.f32 %v2190, %v2231
    %2233 = vdwg.mxu0
    %2234 = vmatpush.msra.mxu0 0.0
    %2235 = vmatpush.msra.mxu0 0.0
    %2236 = vmatpush.msra.mxu0 0.0
    %2237 = vmatpush.msra.mxu0 0.0
    %2238 = vmatpush.msra.mxu0 0.0
    %2239 = vmatpush.msra.mxu0 0.0
    %2240 = vmatpush.msra.mxu0 0.0
    %2241 = vmatpush.msra.mxu0 0.0
    %2242 = vmatpush.msra.mxu0 0.0
    %2243 = vmatpush.msra.mxu0 0.0
    %2244 = vmatpush.msra.mxu0 0.0
    %2245 = vmatpush.msra.mxu0 0.0
    %2246 = vmatpush.msra.mxu0 0.0
    %2247 = vmatpush.msra.mxu0 0.0
    %2248 = vmatpush.msra.mxu0 0.0
    %v2249 = vand.u32 %v2063, 4294901760
    %v2250 = vsub.f32 %v2063, %v2249
    %v2251 = vand.u32 %v2250, 4294901760
    %2252 = vmatpush.msra.mxu0 %v2251
    %v2253 = vand.u32 %v2051, 4294901760
    %2254 = vmatmul.f32.gmra.mxu0 %v2253
    %v2255 = vpop.f32.mrf.mxu0
    %v2256 = vadd.f32 %v2214, %v2255
    %v2257 = vand.u32 %v2054, 4294901760
    %2258 = vmatmul.f32.gmra.mxu0 %v2257
    %v2259 = vpop.f32.mrf.mxu0
    %v2260 = vadd.f32 %v2220, %v2259
    %v2261 = vand.u32 %v2057, 4294901760
    %2262 = vmatmul.f32.gmra.mxu0 %v2261
    %v2263 = vpop.f32.mrf.mxu0
    %v2264 = vadd.f32 %v2226, %v2263
    %v2265 = vand.u32 %v2060, 4294901760
    %2266 = vmatmul.f32.gmra.mxu0 %v2265
    %v2267 = vpop.f32.mrf.mxu0
    %v2268 = vadd.f32 %v2232, %v2267
    %2269 = vdwg.mxu0
    %2270 = vmatpush.msra.mxu0 0.0
    %2271 = vmatpush.msra.mxu0 0.0
    %2272 = vmatpush.msra.mxu0 0.0
    %2273 = vmatpush.msra.mxu0 0.0
    %2274 = vmatpush.msra.mxu0 0.0
    %2275 = vmatpush.msra.mxu0 0.0
    %2276 = vmatpush.msra.mxu0 0.0
    %2277 = vmatpush.msra.mxu0 0.0
    %2278 = vmatpush.msra.mxu0 0.0
    %2279 = vmatpush.msra.mxu0 0.0
    %2280 = vmatpush.msra.mxu0 0.0
    %2281 = vmatpush.msra.mxu0 0.0
    %2282 = vmatpush.msra.mxu0 0.0
    %2283 = vmatpush.msra.mxu0 0.0
    %2284 = vmatpush.msra.mxu0 0.0
    %v2285 = vand.u32 %v2063, 4294901760
    %2286 = vmatpush.msra.mxu0 %v2285
    %v2287 = vand.u32 %v2051, 4294901760
    %2288 = vmatmul.f32.gmra.mxu0 %v2287
    %v2289 = vpop.f32.mrf.mxu0
    %v2290 = vadd.f32 %v2256, %v2289
    %v2291 = vand.u32 %v2054, 4294901760
    %2292 = vmatmul.f32.gmra.mxu0 %v2291
    %v2293 = vpop.f32.mrf.mxu0
    %v2294 = vadd.f32 %v2260, %v2293
    %v2295 = vand.u32 %v2057, 4294901760
    %2296 = vmatmul.f32.gmra.mxu0 %v2295
    %v2297 = vpop.f32.mrf.mxu0
    %v2298 = vadd.f32 %v2264, %v2297
    %v2299 = vand.u32 %v2060, 4294901760
    %2300 = vmatmul.f32.gmra.mxu0 %v2299
    %v2301 = vpop.f32.mrf.mxu0
    %v2302 = vadd.f32 %v2268, %v2301
    %2303 = vdwg.mxu0
    %v2304 = vmul.f32 %v21, %v2290
    %v2305 = vmul.f32 %v22, %v2294
    %v2306 = vmul.f32 %v23, %v2298
    %v2307 = vmul.f32 %v24, %v2302
    %2308 = vst [vmem:[#allocation2] sm:$0xff] %v2304
    %2309 = vst [vmem:[#allocation2 + $0x8] sm:$0xff] %v2305
    %2310 = vst [vmem:[#allocation2 + $0x10] sm:$0xff] %v2306
    %2311 = vst [vmem:[#allocation2 + $0x18] sm:$0xff] %v2307
    // Predicated region
    $region22: #{tpu_custom_call.1} parent=1 // pred_check
      _
    $region23: #{tpu_custom_call.1} parent=1 // pred_check_branch
      %2313 = sbr.rel (0) target = $region25
    $region24: #{tpu_custom_call.1} parent=1 // pred_region
      %2315 = vsyncadd [#allocation3], 0
      %s2316 = sshll.u32 [#allocation2], 4
      %s2317 = int_to_ptr.vmem [resolvable:$true] %s2316
      %s2318 = sshll.u32 %s5, 4
      %s2319 = int_to_ptr.hbm [resolvable:$true] %s2318
      %2324 = dma.vmem_to_hbm [thread:$0]  %s2317, 512, %s2319, [#allocation3], 128, 128, 8
    $region25: #{tpu_custom_call.1} parent=1 // pred_fallthru
      _
    // Predicated region
    $region26: #{tpu_custom_call.1} parent=1 // pred_check
      _
    $region27: #{tpu_custom_call.1} parent=1 // pred_check_branch
      %2326 = sbr.rel (0) target = $region29
    $region28: #{tpu_custom_call.1} parent=1 // pred_region
      %2328 = dma.done [#allocation3], 512
    $region29: #{tpu_custom_call.1} parent=1 // pred_fallthru
      _
    %2329 = vsyncpa [#allocation3], 1

</llo_original>
